<compile_context>
chip_gen: v7x
topology: tpu7x:2x2x1
jax: 0.10.0
libtpu: 0.0.40
codegen_flags: <defaults>
</compile_context>

<pallas_src>
from collections import deque

import numpy as np
import jax
import jax.numpy as jnp
from jax import lax
from jax.experimental import pallas as pl
from jax.experimental.pallas import tpu as pltpu

HIDDEN = 32
VOCAB = 20


def _round_up(x, m):
    return ((x + m - 1) // m) * m


# ----------------------------------------------------------------------------
# Fused encoder kernel: level-loop GRU message passing + node readout
# ----------------------------------------------------------------------------
def make_encoder_kernel(L, LVL, H):
    H2 = 2 * H

    def kernel(src_x_ref, dst_x_ref,                 # [L*LVL, H]
               gsel_ref, sct_ref,                    # [L, LVL, E_pad], [L, E_pad, LVL]
               w_src_ref, w_msg_ref, b_zh_ref,       # fused gate weights
               w_r_ref, u_r_ref, b_r_ref,
               a_in_ref, x_ref,                      # readout inputs
               wg_x_ref, wg_m_ref, bg_ref,
               h_ref,                                # [N_pad, H] output
               src_pre_ref, dst_pre_ref, state_ref):  # VMEM scratch
        # ---- hoisted, level-invariant work -----------------------------------
        state_ref[...] = jnp.zeros_like(state_ref)

        # One big matmul per gate input for ALL levels at once (M = L*LVL),
        # instead of 2 tiny per-level matmuls.
        src_pre_ref[...] = (
            jnp.dot(src_x_ref[...], w_src_ref[...],
                    preferred_element_type=jnp.float32) + b_zh_ref[...])
        dst_pre_ref[...] = (
            jnp.dot(dst_x_ref[...], w_r_ref[...],
                    preferred_element_type=jnp.float32) + b_r_ref[...])

        w_msg = w_msg_ref[...]       # [2H, 2H] block-diag (wz_s | wh_r)
        u_r = u_r_ref[...]           # [H, H]

        # ---- level loop (statically unrolled; L is small) --------------------
        for l in range(L):
            state = state_ref[...]                       # [E_pad, 2H] = [m | rm]
            sel_l = gsel_ref[l]                          # [LVL, E_pad] one-hot preds
            sct_l = sct_ref[l]                           # [E_pad, LVL] one-hot dests

            # line-graph pull (no backtracking) as an MXU matmul
            agg = jnp.dot(sel_l, state,
                          preferred_element_type=jnp.float32)   # [LVL, 2H]=[s|accum_rm]
            s = agg[:, :H]

            zh = (src_pre_ref[l * LVL:(l + 1) * LVL, :]
                  + jnp.dot(agg, w_msg, preferred_element_type=jnp.float32))
            z = 1.0 / (1.0 + jnp.exp(-zh[:, :H]))
            m_new = (1.0 - z) * s + z * jnp.tanh(zh[:, H:])

            pre_r = (dst_pre_ref[l * LVL:(l + 1) * LVL, :]
                     + jnp.dot(m_new, u_r, preferred_element_type=jnp.float32))
            r = 1.0 / (1.0 + jnp.exp(-pre_r))

            new = jnp.concatenate([m_new, r * m_new], axis=-1)   # [LVL, 2H]

            # branch-free scatter: one-hot matmul + keep-mask blend
            wmask = jnp.sum(sct_l, axis=-1, keepdims=True)       # [E_pad, 1] 0/1
            state_ref[...] = (state * (1.0 - wmask)
                              + jnp.dot(sct_l, new,
                                        preferred_element_type=jnp.float32))

        # ---- node readout: h = relu(W [x ; A_in @ m] + b), only the m half ----
        state = state_ref[...]
        m_node = jnp.dot(a_in_ref[...], state[:, :H],
                         preferred_element_type=jnp.float32)     # [N_pad, H]
        pre = (jnp.dot(x_ref[...], wg_x_ref[...],
                       preferred_element_type=jnp.float32)
               + jnp.dot(m_node, wg_m_ref[...],
                         preferred_element_type=jnp.float32)
               + bg_ref[...])
        h_ref[...] = jnp.maximum(pre, 0.0)

    return kernel


def encoder_pallas(graph, src_x_flat, dst_x_flat, x_pad, p):
    H = HIDDEN
    H2 = 2 * H
    L, LVL = graph['L'], graph['LVL']
    E_pad, N_pad = graph['E_pad'], graph['N_pad']

    gsel = jnp.asarray(graph['gather_sel'])      # [L, LVL, E_pad]
    sct = jnp.asarray(graph['scatter_T'])        # [L, E_pad, LVL]
    a_in = jnp.asarray(graph['A_in_pad'])        # [N_pad, E_pad]

    inputs = (src_x_flat, dst_x_flat, gsel, sct,
              p['w_src'], p['w_msg'], p['b_zh'], p['w_r'], p['u_r'], p['b_r'],
              a_in, x_pad, p['wg_x'], p['wg_m'], p['bg'])

    def full_spec(shape):
        zeros = (0,) * len(shape)
        return pl.BlockSpec(shape, lambda i, _z=zeros: _z)

    return pl.pallas_call(
        make_encoder_kernel(L, LVL, H),
        grid=(1,),
        in_specs=[full_spec(a.shape) for a in inputs],
        out_specs=full_spec((N_pad, H)),
        out_shape=jax.ShapeDtypeStruct((N_pad, H), jnp.float32),
        scratch_shapes=[pltpu.VMEM((L * LVL, H2), jnp.float32),   # src gate preacts
                        pltpu.VMEM((L * LVL, H), jnp.float32),    # dst gate preacts
                        pltpu.VMEM((E_pad, H2), jnp.float32)],    # resident [m | rm]
        compiler_params=pltpu.CompilerParams(
            dimension_semantics=("arbitrary",),
            vmem_limit_bytes=64 * 1024 * 1024),
    )(*inputs)


def run_encoder_pallas(graph, wid, params):
    H = HIDDEN
    x = params['emb'][wid]                                       # [N, H]
    x_pad = jnp.zeros((graph['N_pad'], H), jnp.float32).at[:x.shape[0]].set(x)
    src_x_flat = x[jnp.asarray(graph['lvl_src_ids'].reshape(-1))]  # [L*LVL, H]
    dst_x_flat = x[jnp.asarray(graph['lvl_dst_ids'].reshape(-1))]
    h_nodes = encoder_pallas(graph, src_x_flat, dst_x_flat, x_pad, params)
    return h_nodes[jnp.asarray(graph['roots'], jnp.int32)]        # root_vecs


# ----------------------------------------------------------------------------
# Pure-JAX reference (dense line-graph formulation) for the correctness check
# ----------------------------------------------------------------------------
def run_encoder_ref(graph, wid, params):
    h = HIDDEN
    E = graph['n_edges']
    x = params['emb'][wid]
    src_x_all = x[graph['src']]
    dst_x_all = x[graph['dst']]
    m_all = jnp.zeros((E, h), jnp.float32)
    rm_all = jnp.zeros((E, h), jnp.float32)
    a_lg = jnp.asarray(graph['A_lg'])
    for eids in graph['level_eids']:
        idx = jnp.asarray(eids, jnp.int32)
        adj = a_lg[idx]
        sx, dx = src_x_all[idx], dst_x_all[idx]
        s = adj @ m_all
        accum_rm = adj @ rm_all
        z = jax.nn.sigmoid(sx @ params['wz_x'] + s @ params['wz_s'] + params['bz'])
        m_new = (1.0 - z) * s + z * jnp.tanh(sx @ params['wh_x']
                                             + accum_rm @ params['wh_r'] + params['bh'])
        r = jax.nn.sigmoid(dx @ params['wr'] + m_new @ params['ur'] + params['bur'])
        m_all = m_all.at[idx].set(m_new)
        rm_all = rm_all.at[idx].set(r * m_new)
    m_node = jnp.asarray(graph['A_in']) @ m_all
    h_nodes = jax.nn.relu(x @ params['wg_x'] + m_node @ params['wg_m'] + params['bg'])
    return h_nodes[jnp.asarray(graph['roots'], jnp.int32)]


# ----------------------------------------------------------------------------
# Graph glue: batching, BFS level ordering, one-hot gather/scatter tables
# ----------------------------------------------------------------------------
def level_order(adj_lists, roots):
    """Replicates jtnn_enc.level_order (BFS levels, bottom-up then top-down)."""
    edge_list = [[]]
    node_depth = {}
    for root in roots:
        node_depth[root] = 0
        visited = {root}
        q = deque([root])
        while q:
            u = q.popleft()
            for v in adj_lists[u]:
                if v not in visited:
                    visited.add(v)
                    node_depth[v] = node_depth[u] + 1
                    if len(edge_list) == node_depth[u]:
                        edge_list.append([])
                    edge_list[node_depth[u]].append((u, v))
                    q.append(v)
    levels = []
    for edges in reversed(edge_list):
        u, v = zip(*edges)
        levels.append((v, u))        # bottom-up: child -> parent
    for edges in edge_list:
        u, v = zip(*edges)
        levels.append((u, v))        # top-down: parent -> child
    return levels


def build_batch(trees):
    """trees: list of (n_nodes, undirected edge list with local node ids)."""
    node_offset = [0]
    undirected = []
    for n, edges in trees:
        off = node_offset[-1]
        node_offset.append(off + n)
        for u, v in edges:
            undirected.append((u + off, v + off))
    n_nodes = node_offset[-1]
    roots = node_offset[:-1]

    adj_lists = {i: [] for i in range(n_nodes)}
    for u, v in undirected:
        adj_lists[u].append(v)
        adj_lists[v].append(u)

    edge_list = []
    for u, v in undirected:
        edge_list.append((u, v))
        edge_list.append((v, u))
    eid = {e: i for i, e in enumerate(edge_list)}
    n_edges = len(edge_list)
    src = np.array([u for u, _ in edge_list], np.int32)
    dst = np.array([v for _, v in edge_list], np.int32)

    # line graph with no backtracking: edge (u,v) pulls from edges (w,u), w != v
    pred_lists = []
    a_lg = np.zeros((n_edges, n_edges), np.float32)     # dense form: reference only
    for i, (u, v) in enumerate(edge_list):
        preds = []
        for j, (w, t) in enumerate(edge_list):
            if t == u and w != v:
                preds.append(j)
                a_lg[i, j] = 1.0
        pred_lists.append(preds)

    # incoming-edge incidence: node v <- edge (u, v)
    a_in = np.zeros((n_nodes, n_edges), np.float32)
    for i, (_, v) in enumerate(edge_list):
        a_in[v, i] = 1.0

    levels = level_order(adj_lists, roots)
    level_eids = [[eid[(s, d)] for s, d in zip(us, vs)] for us, vs in levels]

    # Padded one-hot tables for the fused kernel.  Padded level slots have
    # all-zero gather rows and all-zero scatter columns -> they contribute
    # nothing and are never written (branch-free by construction).
    L = len(level_eids)
    LVL = _round_up(max(len(e) for e in level_eids), 8)
    E_pad = _round_up(n_edges, 8)
    N_pad = _round_up(n_nodes, 8)

    gather_sel = np.zeros((L, LVL, E_pad), np.float32)   # [lvl, slot, pred edge]
    scatter_t = np.zeros((L, E_pad, LVL), np.float32)    # [lvl, edge, slot]
    lvl_src_ids = np.zeros((L, LVL), np.int32)
    lvl_dst_ids = np.zeros((L, LVL), np.int32)
    for li, eids_l in enumerate(level_eids):
        for j, e in enumerate(eids_l):
            lvl_src_ids[li, j] = src[e]
            lvl_dst_ids[li, j] = dst[e]
            scatter_t[li, e, j] = 1.0
            for pe in pred_lists[e]:
                gather_sel[li, j, pe] = 1.0

    a_in_pad = np.zeros((N_pad, E_pad), np.float32)
    a_in_pad[:n_nodes, :n_edges] = a_in

    return dict(n_nodes=n_nodes, n_edges=n_edges, roots=roots, src=src, dst=dst,
                A_lg=a_lg, A_in=a_in, A_in_pad=a_in_pad, level_eids=level_eids,
                L=L, LVL=LVL, E_pad=E_pad, N_pad=N_pad,
                gather_sel=gather_sel, scatter_T=scatter_t,
                lvl_src_ids=lvl_src_ids, lvl_dst_ids=lvl_dst_ids)


# ----------------------------------------------------------------------------
# Parameters (deterministic synthetic init; shapes follow the nn.Module)
# ----------------------------------------------------------------------------
def init_params(key, h, vocab):
    ks = jax.random.split(key, 10)
    scale = 0.1

    def mat(k, o, i):
        return jax.random.normal(k, (o, i), jnp.float32) * scale

    emb = jax.random.normal(ks[0], (vocab, h), jnp.float32) * scale
    w_z = mat(ks[1], h, 2 * h); b_z = jax.random.normal(ks[2], (h,), jnp.float32) * scale
    w_r = mat(ks[3], h, h)                                       # bias=False
    u_r = mat(ks[4], h, h);     b_ur = jax.random.normal(ks[5], (h,), jnp.float32) * scale
    w_h = mat(ks[6], h, 2 * h); b_h = jax.random.normal(ks[7], (h,), jnp.float32) * scale
    w_g = mat(ks[8], h, 2 * h); b_g = jax.random.normal(ks[9], (h,), jnp.float32) * scale

    wz_x, wz_s = w_z[:, :h].T, w_z[:, h:].T
    wh_x, wh_r = w_h[:, :h].T, w_h[:, h:].T
    wg_x, wg_m = w_g[:, :h].T, w_g[:, h:].T

    # fused weights for the Pallas kernel
    w_msg = jnp.zeros((2 * h, 2 * h), jnp.float32)
    w_msg = w_msg.at[:h, :h].set(wz_s).at[h:, h:].set(wh_r)       # block-diag

    return dict(
        emb=emb,
        # split layout (pure-JAX reference)
        wz_x=wz_x, wz_s=wz_s, bz=b_z[None, :],
        wr=w_r.T, ur=u_r.T, bur=b_ur[None, :],
        wh_x=wh_x, wh_r=wh_r, bh=b_h[None, :],
        wg_x=wg_x, wg_m=wg_m, bg=b_g[None, :],
        # fused layout (Pallas kernel)
        w_src=jnp.concatenate([wz_x, wh_x], axis=1),              # [h, 2h]
        w_msg=w_msg,                                              # [2h, 2h]
        b_zh=jnp.concatenate([b_z, b_h])[None, :],                # [1, 2h]
        w_r=w_r.T, u_r=u_r.T, b_r=b_ur[None, :],
    )


# ----------------------------------------------------------------------------
if __name__ == "__main__":
    key = jax.random.PRNGKey(0)
    pkey, widkey = jax.random.split(key)
    params = init_params(pkey, HIDDEN, VOCAB)

    # two small junction trees: 5-node tree and 3-node chain (roots = node 0)
    trees = [(5, [(0, 1), (0, 2), (1, 3), (1, 4)]),
             (3, [(0, 1), (1, 2)])]
    graph = build_batch(trees)

    wid = jax.random.randint(widkey, (graph['n_nodes'],), 0, VOCAB)

    root_vecs = jax.block_until_ready(run_encoder_pallas(graph, wid, params))
    ref = jax.block_until_ready(run_encoder_ref(graph, wid, params))

    np.testing.assert_allclose(np.asarray(root_vecs), np.asarray(ref),
                               rtol=2e-3, atol=2e-3)
    print("KERNEL_OK")
</pallas_src>

<mosaic_0001>
module attributes {stable_mosaic.version = 11 : i64} {
  func.func @kernel(%arg0: i32, %arg1: memref<32x32xf32, #tpu.memory_space<vmem>>, %arg2: memref<32x32xf32, #tpu.memory_space<vmem>>, %arg3: memref<4x8x16xf32, #tpu.memory_space<vmem>>, %arg4: memref<4x16x8xf32, #tpu.memory_space<vmem>>, %arg5: memref<32x64xf32, #tpu.memory_space<vmem>>, %arg6: memref<64x64xf32, #tpu.memory_space<vmem>>, %arg7: memref<1x64xf32, #tpu.memory_space<vmem>>, %arg8: memref<32x32xf32, #tpu.memory_space<vmem>>, %arg9: memref<32x32xf32, #tpu.memory_space<vmem>>, %arg10: memref<1x32xf32, #tpu.memory_space<vmem>>, %arg11: memref<8x16xf32, #tpu.memory_space<vmem>>, %arg12: memref<8x32xf32, #tpu.memory_space<vmem>>, %arg13: memref<32x32xf32, #tpu.memory_space<vmem>>, %arg14: memref<32x32xf32, #tpu.memory_space<vmem>>, %arg15: memref<1x32xf32, #tpu.memory_space<vmem>>, %arg16: memref<8x32xf32, #tpu.memory_space<vmem>>, %arg17: memref<32x64xf32, #tpu.memory_space<vmem>>, %arg18: memref<32x32xf32, #tpu.memory_space<vmem>>, %arg19: memref<16x64xf32, #tpu.memory_space<vmem>>) attributes {dimension_semantics = [#tpu.dimension_semantics<arbitrary>], iteration_bounds = array<i64: 1>, scalar_prefetch = 0 : i64, scratch_operands = 3 : i64, tpu.core_type = #tpu.core_type<tc>, window_params = [{pipeline_mode = #tpu.pipeline_mode<synchronous>, transform_indices = @transform_0, window_bounds = array<i64: 32, 32>}, {pipeline_mode = #tpu.pipeline_mode<synchronous>, transform_indices = @transform_1, window_bounds = array<i64: 32, 32>}, {pipeline_mode = #tpu.pipeline_mode<synchronous>, transform_indices = @transform_2, window_bounds = array<i64: 4, 8, 16>}, {pipeline_mode = #tpu.pipeline_mode<synchronous>, transform_indices = @transform_3, window_bounds = array<i64: 4, 16, 8>}, {pipeline_mode = #tpu.pipeline_mode<synchronous>, transform_indices = @transform_4, window_bounds = array<i64: 32, 64>}, {pipeline_mode = #tpu.pipeline_mode<synchronous>, transform_indices = @transform_5, window_bounds = array<i64: 64, 64>}, {pipeline_mode = #tpu.pipeline_mode<synchronous>, transform_indices = @transform_6, window_bounds = array<i64: 1, 64>}, {pipeline_mode = #tpu.pipeline_mode<synchronous>, transform_indices = @transform_7, window_bounds = array<i64: 32, 32>}, {pipeline_mode = #tpu.pipeline_mode<synchronous>, transform_indices = @transform_8, window_bounds = array<i64: 32, 32>}, {pipeline_mode = #tpu.pipeline_mode<synchronous>, transform_indices = @transform_9, window_bounds = array<i64: 1, 32>}, {pipeline_mode = #tpu.pipeline_mode<synchronous>, transform_indices = @transform_10, window_bounds = array<i64: 8, 16>}, {pipeline_mode = #tpu.pipeline_mode<synchronous>, transform_indices = @transform_11, window_bounds = array<i64: 8, 32>}, {pipeline_mode = #tpu.pipeline_mode<synchronous>, transform_indices = @transform_12, window_bounds = array<i64: 32, 32>}, {pipeline_mode = #tpu.pipeline_mode<synchronous>, transform_indices = @transform_13, window_bounds = array<i64: 32, 32>}, {pipeline_mode = #tpu.pipeline_mode<synchronous>, transform_indices = @transform_14, window_bounds = array<i64: 1, 32>}, {pipeline_mode = #tpu.pipeline_mode<synchronous>, transform_indices = @transform_15, window_bounds = array<i64: 8, 32>}]} {
    %cst = arith.constant 0.000000e+00 : f32
    %0 = vector.broadcast %cst : f32 to vector<16x64xf32>
    %c0 = arith.constant 0 : index
    %c0_0 = arith.constant 0 : index
    %1 = vector.load %arg19[%c0, %c0_0] : memref<16x64xf32, #tpu.memory_space<vmem>>, vector<16x64xf32>
    tpu.vector_store %arg19[%c0, %c0_0], %0 {strides = array<i32>} : memref<16x64xf32, #tpu.memory_space<vmem>>, vector<16x64xf32>,
    %c0_1 = arith.constant 0 : index
    %c0_2 = arith.constant 0 : index
    %2 = vector.load %arg1[%c0_1, %c0_2] : memref<32x32xf32, #tpu.memory_space<vmem>>, vector<32x32xf32>
    %c0_3 = arith.constant 0 : index
    %c0_4 = arith.constant 0 : index
    %3 = vector.load %arg5[%c0_3, %c0_4] : memref<32x64xf32, #tpu.memory_space<vmem>>, vector<32x64xf32>
    %cst_5 = arith.constant dense<0.000000e+00> : vector<32x64xf32>
    %4 = tpu.matmul %2, %3, %cst_5 {dimension_numbers = #tpu.dot_dimension_numbers<[1], [0], [0], [1], [0, 0, 1, 1], [], []>} : vector<32x32xf32>, vector<32x64xf32>, vector<32x64xf32> -> vector<32x64xf32>
    %c0_6 = arith.constant 0 : index
    %c0_7 = arith.constant 0 : index
    %5 = vector.load %arg7[%c0_6, %c0_7] : memref<1x64xf32, #tpu.memory_space<vmem>>, vector<1x64xf32>
    %6 = vector.broadcast %5 : vector<1x64xf32> to vector<32x64xf32>
    %7 = arith.addf %4, %6 : vector<32x64xf32>
    %c0_8 = arith.constant 0 : index
    %c0_9 = arith.constant 0 : index
    %8 = vector.load %arg17[%c0_8, %c0_9] : memref<32x64xf32, #tpu.memory_space<vmem>>, vector<32x64xf32>
    tpu.vector_store %arg17[%c0_8, %c0_9], %7 {strides = array<i32>} : memref<32x64xf32, #tpu.memory_space<vmem>>, vector<32x64xf32>,
    %c0_10 = arith.constant 0 : index
    %c0_11 = arith.constant 0 : index
    %9 = vector.load %arg2[%c0_10, %c0_11] : memref<32x32xf32, #tpu.memory_space<vmem>>, vector<32x32xf32>
    %c0_12 = arith.constant 0 : index
    %c0_13 = arith.constant 0 : index
    %10 = vector.load %arg8[%c0_12, %c0_13] : memref<32x32xf32, #tpu.memory_space<vmem>>, vector<32x32xf32>
    %cst_14 = arith.constant dense<0.000000e+00> : vector<32x32xf32>
    %11 = tpu.matmul %9, %10, %cst_14 {dimension_numbers = #tpu.dot_dimension_numbers<[1], [0], [0], [1], [0, 0, 1, 1], [], []>} : vector<32x32xf32>, vector<32x32xf32>, vector<32x32xf32> -> vector<32x32xf32>
    %c0_15 = arith.constant 0 : index
    %c0_16 = arith.constant 0 : index
    %12 = vector.load %arg10[%c0_15, %c0_16] : memref<1x32xf32, #tpu.memory_space<vmem>>, vector<1x32xf32>
    %13 = vector.broadcast %12 : vector<1x32xf32> to vector<32x32xf32>
    %14 = arith.addf %11, %13 : vector<32x32xf32>
    %c0_17 = arith.constant 0 : index
    %c0_18 = arith.constant 0 : index
    %15 = vector.load %arg18[%c0_17, %c0_18] : memref<32x32xf32, #tpu.memory_space<vmem>>, vector<32x32xf32>
    tpu.vector_store %arg18[%c0_17, %c0_18], %14 {strides = array<i32>} : memref<32x32xf32, #tpu.memory_space<vmem>>, vector<32x32xf32>,
    %c0_19 = arith.constant 0 : index
    %c0_20 = arith.constant 0 : index
    %16 = vector.load %arg6[%c0_19, %c0_20] : memref<64x64xf32, #tpu.memory_space<vmem>>, vector<64x64xf32>
    %c0_21 = arith.constant 0 : index
    %c0_22 = arith.constant 0 : index
    %17 = vector.load %arg9[%c0_21, %c0_22] : memref<32x32xf32, #tpu.memory_space<vmem>>, vector<32x32xf32>
    %c0_23 = arith.constant 0 : index
    %c0_24 = arith.constant 0 : index
    %18 = vector.load %arg19[%c0_23, %c0_24] : memref<16x64xf32, #tpu.memory_space<vmem>>, vector<16x64xf32>
    %c0_25 = arith.constant 0 : index
    %c0_26 = arith.constant 0 : index
    %c0_27 = arith.constant 0 : index
    %19 = vector.load %arg3[%c0_25, %c0_26, %c0_27] : memref<4x8x16xf32, #tpu.memory_space<vmem>>, vector<1x8x16xf32>
    %20 = vector.shape_cast %19 : vector<1x8x16xf32> to vector<8x16xf32>
    %c0_28 = arith.constant 0 : index
    %c0_29 = arith.constant 0 : index
    %c0_30 = arith.constant 0 : index
    %21 = vector.load %arg4[%c0_28, %c0_29, %c0_30] : memref<4x16x8xf32, #tpu.memory_space<vmem>>, vector<1x16x8xf32>
    %22 = vector.shape_cast %21 : vector<1x16x8xf32> to vector<16x8xf32>
    %cst_31 = arith.constant dense<0.000000e+00> : vector<8x64xf32>
    %23 = tpu.matmul %20, %18, %cst_31 {dimension_numbers = #tpu.dot_dimension_numbers<[1], [0], [0], [1], [0, 0, 1, 1], [], []>} : vector<8x16xf32>, vector<16x64xf32>, vector<8x64xf32> -> vector<8x64xf32>
    %24 = vector.extract_strided_slice %23 {offsets = [0, 0], sizes = [8, 32], strides = [1, 1]} : vector<8x64xf32> to vector<8x32xf32>
    %c0_32 = arith.constant 0 : index
    %c0_33 = arith.constant 0 : index
    %25 = vector.load %arg17[%c0_32, %c0_33] : memref<32x64xf32, #tpu.memory_space<vmem>>, vector<8x64xf32>
    %cst_34 = arith.constant dense<0.000000e+00> : vector<8x64xf32>
    %26 = tpu.matmul %23, %16, %cst_34 {dimension_numbers = #tpu.dot_dimension_numbers<[1], [0], [0], [1], [0, 0, 1, 1], [], []>} : vector<8x64xf32>, vector<64x64xf32>, vector<8x64xf32> -> vector<8x64xf32>
    %27 = arith.addf %25, %26 : vector<8x64xf32>
    %28 = vector.extract_strided_slice %27 {offsets = [0, 0], sizes = [8, 32], strides = [1, 1]} : vector<8x64xf32> to vector<8x32xf32>
    %cst_35 = arith.constant 0.000000e+00 : f32
    %29 = vector.broadcast %cst_35 : f32 to vector<8x32xf32>
    %30 = arith.subf %29, %28 : vector<8x32xf32>
    %31 = math.exp %30 : vector<8x32xf32>
    %cst_36 = arith.constant 1.000000e+00 : f32
    %32 = vector.broadcast %cst_36 : f32 to vector<8x32xf32>
    %33 = arith.addf %32, %31 : vector<8x32xf32>
    %cst_37 = arith.constant 1.000000e+00 : f32
    %34 = vector.broadcast %cst_37 : f32 to vector<8x32xf32>
    %35 = arith.divf %34, %33 : vector<8x32xf32>
    %cst_38 = arith.constant 1.000000e+00 : f32
    %36 = vector.broadcast %cst_38 : f32 to vector<8x32xf32>
    %37 = arith.subf %36, %35 : vector<8x32xf32>
    %38 = arith.mulf %37, %24 : vector<8x32xf32>
    %39 = vector.extract_strided_slice %27 {offsets = [0, 32], sizes = [8, 32], strides = [1, 1]} : vector<8x64xf32> to vector<8x32xf32>
    %40 = math.tanh %39 : vector<8x32xf32>
    %41 = arith.mulf %35, %40 : vector<8x32xf32>
    %42 = arith.addf %38, %41 : vector<8x32xf32>
    %c0_39 = arith.constant 0 : index
    %c0_40 = arith.constant 0 : index
    %43 = vector.load %arg18[%c0_39, %c0_40] : memref<32x32xf32, #tpu.memory_space<vmem>>, vector<8x32xf32>
    %cst_41 = arith.constant dense<0.000000e+00> : vector<8x32xf32>
    %44 = tpu.matmul %42, %17, %cst_41 {dimension_numbers = #tpu.dot_dimension_numbers<[1], [0], [0], [1], [0, 0, 1, 1], [], []>} : vector<8x32xf32>, vector<32x32xf32>, vector<8x32xf32> -> vector<8x32xf32>
    %45 = arith.addf %43, %44 : vector<8x32xf32>
    %cst_42 = arith.constant 0.000000e+00 : f32
    %46 = vector.broadcast %cst_42 : f32 to vector<8x32xf32>
    %47 = arith.subf %46, %45 : vector<8x32xf32>
    %48 = math.exp %47 : vector<8x32xf32>
    %cst_43 = arith.constant 1.000000e+00 : f32
    %49 = vector.broadcast %cst_43 : f32 to vector<8x32xf32>
    %50 = arith.addf %49, %48 : vector<8x32xf32>
    %cst_44 = arith.constant 1.000000e+00 : f32
    %51 = vector.broadcast %cst_44 : f32 to vector<8x32xf32>
    %52 = arith.divf %51, %50 : vector<8x32xf32>
    %53 = arith.mulf %52, %42 : vector<8x32xf32>
    %54 = tpu.concatenate %42, %53 in 1 : vector<8x32xf32>, vector<8x32xf32> -> vector<8x64xf32>
    %cst_45 = arith.constant dense<0.000000e+00> : vector<16xf32>
    %55 = vector.multi_reduction <add>, %22, %cst_45 [1] : vector<16x8xf32> to vector<16xf32>
    %56 = vector.shape_cast %55 : vector<16xf32> to vector<16x1xf32>
    %cst_46 = arith.constant 1.000000e+00 : f32
    %57 = vector.broadcast %cst_46 : f32 to vector<16x1xf32>
    %58 = arith.subf %57, %56 : vector<16x1xf32>
    %59 = vector.broadcast %58 : vector<16x1xf32> to vector<16x64xf32>
    %60 = arith.mulf %18, %59 : vector<16x64xf32>
    %cst_47 = arith.constant dense<0.000000e+00> : vector<16x64xf32>
    %61 = tpu.matmul %22, %54, %cst_47 {dimension_numbers = #tpu.dot_dimension_numbers<[1], [0], [0], [1], [0, 0, 1, 1], [], []>} : vector<16x8xf32>, vector<8x64xf32>, vector<16x64xf32> -> vector<16x64xf32>
    %62 = arith.addf %60, %61 : vector<16x64xf32>
    %c0_48 = arith.constant 0 : index
    %c0_49 = arith.constant 0 : index
    %63 = vector.load %arg19[%c0_48, %c0_49] : memref<16x64xf32, #tpu.memory_space<vmem>>, vector<16x64xf32>
    tpu.vector_store %arg19[%c0_48, %c0_49], %62 {strides = array<i32>} : memref<16x64xf32, #tpu.memory_space<vmem>>, vector<16x64xf32>,
    %c0_50 = arith.constant 0 : index
    %c0_51 = arith.constant 0 : index
    %64 = vector.load %arg19[%c0_50, %c0_51] : memref<16x64xf32, #tpu.memory_space<vmem>>, vector<16x64xf32>
    %c1 = arith.constant 1 : index
    %c0_52 = arith.constant 0 : index
    %c0_53 = arith.constant 0 : index
    %65 = vector.load %arg3[%c1, %c0_52, %c0_53] : memref<4x8x16xf32, #tpu.memory_space<vmem>>, vector<1x8x16xf32>
    %66 = vector.shape_cast %65 : vector<1x8x16xf32> to vector<8x16xf32>
    %c1_54 = arith.constant 1 : index
    %c0_55 = arith.constant 0 : index
    %c0_56 = arith.constant 0 : index
    %67 = vector.load %arg4[%c1_54, %c0_55, %c0_56] : memref<4x16x8xf32, #tpu.memory_space<vmem>>, vector<1x16x8xf32>
    %68 = vector.shape_cast %67 : vector<1x16x8xf32> to vector<16x8xf32>
    %cst_57 = arith.constant dense<0.000000e+00> : vector<8x64xf32>
    %69 = tpu.matmul %66, %64, %cst_57 {dimension_numbers = #tpu.dot_dimension_numbers<[1], [0], [0], [1], [0, 0, 1, 1], [], []>} : vector<8x16xf32>, vector<16x64xf32>, vector<8x64xf32> -> vector<8x64xf32>
    %70 = vector.extract_strided_slice %69 {offsets = [0, 0], sizes = [8, 32], strides = [1, 1]} : vector<8x64xf32> to vector<8x32xf32>
    %c8 = arith.constant 8 : index
    %c0_58 = arith.constant 0 : index
    %71 = vector.load %arg17[%c8, %c0_58] : memref<32x64xf32, #tpu.memory_space<vmem>>, vector<8x64xf32>
    %cst_59 = arith.constant dense<0.000000e+00> : vector<8x64xf32>
    %72 = tpu.matmul %69, %16, %cst_59 {dimension_numbers = #tpu.dot_dimension_numbers<[1], [0], [0], [1], [0, 0, 1, 1], [], []>} : vector<8x64xf32>, vector<64x64xf32>, vector<8x64xf32> -> vector<8x64xf32>
    %73 = arith.addf %71, %72 : vector<8x64xf32>
    %74 = vector.extract_strided_slice %73 {offsets = [0, 0], sizes = [8, 32], strides = [1, 1]} : vector<8x64xf32> to vector<8x32xf32>
    %cst_60 = arith.constant 0.000000e+00 : f32
    %75 = vector.broadcast %cst_60 : f32 to vector<8x32xf32>
    %76 = arith.subf %75, %74 : vector<8x32xf32>
    %77 = math.exp %76 : vector<8x32xf32>
    %cst_61 = arith.constant 1.000000e+00 : f32
    %78 = vector.broadcast %cst_61 : f32 to vector<8x32xf32>
    %79 = arith.addf %78, %77 : vector<8x32xf32>
    %cst_62 = arith.constant 1.000000e+00 : f32
    %80 = vector.broadcast %cst_62 : f32 to vector<8x32xf32>
    %81 = arith.divf %80, %79 : vector<8x32xf32>
    %cst_63 = arith.constant 1.000000e+00 : f32
    %82 = vector.broadcast %cst_63 : f32 to vector<8x32xf32>
    %83 = arith.subf %82, %81 : vector<8x32xf32>
    %84 = arith.mulf %83, %70 : vector<8x32xf32>
    %85 = vector.extract_strided_slice %73 {offsets = [0, 32], sizes = [8, 32], strides = [1, 1]} : vector<8x64xf32> to vector<8x32xf32>
    %86 = math.tanh %85 : vector<8x32xf32>
    %87 = arith.mulf %81, %86 : vector<8x32xf32>
    %88 = arith.addf %84, %87 : vector<8x32xf32>
    %c8_64 = arith.constant 8 : index
    %c0_65 = arith.constant 0 : index
    %89 = vector.load %arg18[%c8_64, %c0_65] : memref<32x32xf32, #tpu.memory_space<vmem>>, vector<8x32xf32>
    %cst_66 = arith.constant dense<0.000000e+00> : vector<8x32xf32>
    %90 = tpu.matmul %88, %17, %cst_66 {dimension_numbers = #tpu.dot_dimension_numbers<[1], [0], [0], [1], [0, 0, 1, 1], [], []>} : vector<8x32xf32>, vector<32x32xf32>, vector<8x32xf32> -> vector<8x32xf32>
    %91 = arith.addf %89, %90 : vector<8x32xf32>
    %cst_67 = arith.constant 0.000000e+00 : f32
    %92 = vector.broadcast %cst_67 : f32 to vector<8x32xf32>
    %93 = arith.subf %92, %91 : vector<8x32xf32>
    %94 = math.exp %93 : vector<8x32xf32>
    %cst_68 = arith.constant 1.000000e+00 : f32
    %95 = vector.broadcast %cst_68 : f32 to vector<8x32xf32>
    %96 = arith.addf %95, %94 : vector<8x32xf32>
    %cst_69 = arith.constant 1.000000e+00 : f32
    %97 = vector.broadcast %cst_69 : f32 to vector<8x32xf32>
    %98 = arith.divf %97, %96 : vector<8x32xf32>
    %99 = arith.mulf %98, %88 : vector<8x32xf32>
    %100 = tpu.concatenate %88, %99 in 1 : vector<8x32xf32>, vector<8x32xf32> -> vector<8x64xf32>
    %cst_70 = arith.constant dense<0.000000e+00> : vector<16xf32>
    %101 = vector.multi_reduction <add>, %68, %cst_70 [1] : vector<16x8xf32> to vector<16xf32>
    %102 = vector.shape_cast %101 : vector<16xf32> to vector<16x1xf32>
    %cst_71 = arith.constant 1.000000e+00 : f32
    %103 = vector.broadcast %cst_71 : f32 to vector<16x1xf32>
    %104 = arith.subf %103, %102 : vector<16x1xf32>
    %105 = vector.broadcast %104 : vector<16x1xf32> to vector<16x64xf32>
    %106 = arith.mulf %64, %105 : vector<16x64xf32>
    %cst_72 = arith.constant dense<0.000000e+00> : vector<16x64xf32>
    %107 = tpu.matmul %68, %100, %cst_72 {dimension_numbers = #tpu.dot_dimension_numbers<[1], [0], [0], [1], [0, 0, 1, 1], [], []>} : vector<16x8xf32>, vector<8x64xf32>, vector<16x64xf32> -> vector<16x64xf32>
    %108 = arith.addf %106, %107 : vector<16x64xf32>
    %c0_73 = arith.constant 0 : index
    %c0_74 = arith.constant 0 : index
    %109 = vector.load %arg19[%c0_73, %c0_74] : memref<16x64xf32, #tpu.memory_space<vmem>>, vector<16x64xf32>
    tpu.vector_store %arg19[%c0_73, %c0_74], %108 {strides = array<i32>} : memref<16x64xf32, #tpu.memory_space<vmem>>, vector<16x64xf32>,
    %c0_75 = arith.constant 0 : index
    %c0_76 = arith.constant 0 : index
    %110 = vector.load %arg19[%c0_75, %c0_76] : memref<16x64xf32, #tpu.memory_space<vmem>>, vector<16x64xf32>
    %c2 = arith.constant 2 : index
    %c0_77 = arith.constant 0 : index
    %c0_78 = arith.constant 0 : index
    %111 = vector.load %arg3[%c2, %c0_77, %c0_78] : memref<4x8x16xf32, #tpu.memory_space<vmem>>, vector<1x8x16xf32>
    %112 = vector.shape_cast %111 : vector<1x8x16xf32> to vector<8x16xf32>
    %c2_79 = arith.constant 2 : index
    %c0_80 = arith.constant 0 : index
    %c0_81 = arith.constant 0 : index
    %113 = vector.load %arg4[%c2_79, %c0_80, %c0_81] : memref<4x16x8xf32, #tpu.memory_space<vmem>>, vector<1x16x8xf32>
    %114 = vector.shape_cast %113 : vector<1x16x8xf32> to vector<16x8xf32>
    %cst_82 = arith.constant dense<0.000000e+00> : vector<8x64xf32>
    %115 = tpu.matmul %112, %110, %cst_82 {dimension_numbers = #tpu.dot_dimension_numbers<[1], [0], [0], [1], [0, 0, 1, 1], [], []>} : vector<8x16xf32>, vector<16x64xf32>, vector<8x64xf32> -> vector<8x64xf32>
    %116 = vector.extract_strided_slice %115 {offsets = [0, 0], sizes = [8, 32], strides = [1, 1]} : vector<8x64xf32> to vector<8x32xf32>
    %c16 = arith.constant 16 : index
    %c0_83 = arith.constant 0 : index
    %117 = vector.load %arg17[%c16, %c0_83] : memref<32x64xf32, #tpu.memory_space<vmem>>, vector<8x64xf32>
    %cst_84 = arith.constant dense<0.000000e+00> : vector<8x64xf32>
    %118 = tpu.matmul %115, %16, %cst_84 {dimension_numbers = #tpu.dot_dimension_numbers<[1], [0], [0], [1], [0, 0, 1, 1], [], []>} : vector<8x64xf32>, vector<64x64xf32>, vector<8x64xf32> -> vector<8x64xf32>
    %119 = arith.addf %117, %118 : vector<8x64xf32>
    %120 = vector.extract_strided_slice %119 {offsets = [0, 0], sizes = [8, 32], strides = [1, 1]} : vector<8x64xf32> to vector<8x32xf32>
    %cst_85 = arith.constant 0.000000e+00 : f32
    %121 = vector.broadcast %cst_85 : f32 to vector<8x32xf32>
    %122 = arith.subf %121, %120 : vector<8x32xf32>
    %123 = math.exp %122 : vector<8x32xf32>
    %cst_86 = arith.constant 1.000000e+00 : f32
    %124 = vector.broadcast %cst_86 : f32 to vector<8x32xf32>
    %125 = arith.addf %124, %123 : vector<8x32xf32>
    %cst_87 = arith.constant 1.000000e+00 : f32
    %126 = vector.broadcast %cst_87 : f32 to vector<8x32xf32>
    %127 = arith.divf %126, %125 : vector<8x32xf32>
    %cst_88 = arith.constant 1.000000e+00 : f32
    %128 = vector.broadcast %cst_88 : f32 to vector<8x32xf32>
    %129 = arith.subf %128, %127 : vector<8x32xf32>
    %130 = arith.mulf %129, %116 : vector<8x32xf32>
    %131 = vector.extract_strided_slice %119 {offsets = [0, 32], sizes = [8, 32], strides = [1, 1]} : vector<8x64xf32> to vector<8x32xf32>
    %132 = math.tanh %131 : vector<8x32xf32>
    %133 = arith.mulf %127, %132 : vector<8x32xf32>
    %134 = arith.addf %130, %133 : vector<8x32xf32>
    %c16_89 = arith.constant 16 : index
    %c0_90 = arith.constant 0 : index
    %135 = vector.load %arg18[%c16_89, %c0_90] : memref<32x32xf32, #tpu.memory_space<vmem>>, vector<8x32xf32>
    %cst_91 = arith.constant dense<0.000000e+00> : vector<8x32xf32>
    %136 = tpu.matmul %134, %17, %cst_91 {dimension_numbers = #tpu.dot_dimension_numbers<[1], [0], [0], [1], [0, 0, 1, 1], [], []>} : vector<8x32xf32>, vector<32x32xf32>, vector<8x32xf32> -> vector<8x32xf32>
    %137 = arith.addf %135, %136 : vector<8x32xf32>
    %cst_92 = arith.constant 0.000000e+00 : f32
    %138 = vector.broadcast %cst_92 : f32 to vector<8x32xf32>
    %139 = arith.subf %138, %137 : vector<8x32xf32>
    %140 = math.exp %139 : vector<8x32xf32>
    %cst_93 = arith.constant 1.000000e+00 : f32
    %141 = vector.broadcast %cst_93 : f32 to vector<8x32xf32>
    %142 = arith.addf %141, %140 : vector<8x32xf32>
    %cst_94 = arith.constant 1.000000e+00 : f32
    %143 = vector.broadcast %cst_94 : f32 to vector<8x32xf32>
    %144 = arith.divf %143, %142 : vector<8x32xf32>
    %145 = arith.mulf %144, %134 : vector<8x32xf32>
    %146 = tpu.concatenate %134, %145 in 1 : vector<8x32xf32>, vector<8x32xf32> -> vector<8x64xf32>
    %cst_95 = arith.constant dense<0.000000e+00> : vector<16xf32>
    %147 = vector.multi_reduction <add>, %114, %cst_95 [1] : vector<16x8xf32> to vector<16xf32>
    %148 = vector.shape_cast %147 : vector<16xf32> to vector<16x1xf32>
    %cst_96 = arith.constant 1.000000e+00 : f32
    %149 = vector.broadcast %cst_96 : f32 to vector<16x1xf32>
    %150 = arith.subf %149, %148 : vector<16x1xf32>
    %151 = vector.broadcast %150 : vector<16x1xf32> to vector<16x64xf32>
    %152 = arith.mulf %110, %151 : vector<16x64xf32>
    %cst_97 = arith.constant dense<0.000000e+00> : vector<16x64xf32>
    %153 = tpu.matmul %114, %146, %cst_97 {dimension_numbers = #tpu.dot_dimension_numbers<[1], [0], [0], [1], [0, 0, 1, 1], [], []>} : vector<16x8xf32>, vector<8x64xf32>, vector<16x64xf32> -> vector<16x64xf32>
    %154 = arith.addf %152, %153 : vector<16x64xf32>
    %c0_98 = arith.constant 0 : index
    %c0_99 = arith.constant 0 : index
    %155 = vector.load %arg19[%c0_98, %c0_99] : memref<16x64xf32, #tpu.memory_space<vmem>>, vector<16x64xf32>
    tpu.vector_store %arg19[%c0_98, %c0_99], %154 {strides = array<i32>} : memref<16x64xf32, #tpu.memory_space<vmem>>, vector<16x64xf32>,
    %c0_100 = arith.constant 0 : index
    %c0_101 = arith.constant 0 : index
    %156 = vector.load %arg19[%c0_100, %c0_101] : memref<16x64xf32, #tpu.memory_space<vmem>>, vector<16x64xf32>
    %c3 = arith.constant 3 : index
    %c0_102 = arith.constant 0 : index
    %c0_103 = arith.constant 0 : index
    %157 = vector.load %arg3[%c3, %c0_102, %c0_103] : memref<4x8x16xf32, #tpu.memory_space<vmem>>, vector<1x8x16xf32>
    %158 = vector.shape_cast %157 : vector<1x8x16xf32> to vector<8x16xf32>
    %c3_104 = arith.constant 3 : index
    %c0_105 = arith.constant 0 : index
    %c0_106 = arith.constant 0 : index
    %159 = vector.load %arg4[%c3_104, %c0_105, %c0_106] : memref<4x16x8xf32, #tpu.memory_space<vmem>>, vector<1x16x8xf32>
    %160 = vector.shape_cast %159 : vector<1x16x8xf32> to vector<16x8xf32>
    %cst_107 = arith.constant dense<0.000000e+00> : vector<8x64xf32>
    %161 = tpu.matmul %158, %156, %cst_107 {dimension_numbers = #tpu.dot_dimension_numbers<[1], [0], [0], [1], [0, 0, 1, 1], [], []>} : vector<8x16xf32>, vector<16x64xf32>, vector<8x64xf32> -> vector<8x64xf32>
    %162 = vector.extract_strided_slice %161 {offsets = [0, 0], sizes = [8, 32], strides = [1, 1]} : vector<8x64xf32> to vector<8x32xf32>
    %c24 = arith.constant 24 : index
    %c0_108 = arith.constant 0 : index
    %163 = vector.load %arg17[%c24, %c0_108] : memref<32x64xf32, #tpu.memory_space<vmem>>, vector<8x64xf32>
    %cst_109 = arith.constant dense<0.000000e+00> : vector<8x64xf32>
    %164 = tpu.matmul %161, %16, %cst_109 {dimension_numbers = #tpu.dot_dimension_numbers<[1], [0], [0], [1], [0, 0, 1, 1], [], []>} : vector<8x64xf32>, vector<64x64xf32>, vector<8x64xf32> -> vector<8x64xf32>
    %165 = arith.addf %163, %164 : vector<8x64xf32>
    %166 = vector.extract_strided_slice %165 {offsets = [0, 0], sizes = [8, 32], strides = [1, 1]} : vector<8x64xf32> to vector<8x32xf32>
    %cst_110 = arith.constant 0.000000e+00 : f32
    %167 = vector.broadcast %cst_110 : f32 to vector<8x32xf32>
    %168 = arith.subf %167, %166 : vector<8x32xf32>
    %169 = math.exp %168 : vector<8x32xf32>
    %cst_111 = arith.constant 1.000000e+00 : f32
    %170 = vector.broadcast %cst_111 : f32 to vector<8x32xf32>
    %171 = arith.addf %170, %169 : vector<8x32xf32>
    %cst_112 = arith.constant 1.000000e+00 : f32
    %172 = vector.broadcast %cst_112 : f32 to vector<8x32xf32>
    %173 = arith.divf %172, %171 : vector<8x32xf32>
    %cst_113 = arith.constant 1.000000e+00 : f32
    %174 = vector.broadcast %cst_113 : f32 to vector<8x32xf32>
    %175 = arith.subf %174, %173 : vector<8x32xf32>
    %176 = arith.mulf %175, %162 : vector<8x32xf32>
    %177 = vector.extract_strided_slice %165 {offsets = [0, 32], sizes = [8, 32], strides = [1, 1]} : vector<8x64xf32> to vector<8x32xf32>
    %178 = math.tanh %177 : vector<8x32xf32>
    %179 = arith.mulf %173, %178 : vector<8x32xf32>
    %180 = arith.addf %176, %179 : vector<8x32xf32>
    %c24_114 = arith.constant 24 : index
    %c0_115 = arith.constant 0 : index
    %181 = vector.load %arg18[%c24_114, %c0_115] : memref<32x32xf32, #tpu.memory_space<vmem>>, vector<8x32xf32>
    %cst_116 = arith.constant dense<0.000000e+00> : vector<8x32xf32>
    %182 = tpu.matmul %180, %17, %cst_116 {dimension_numbers = #tpu.dot_dimension_numbers<[1], [0], [0], [1], [0, 0, 1, 1], [], []>} : vector<8x32xf32>, vector<32x32xf32>, vector<8x32xf32> -> vector<8x32xf32>
    %183 = arith.addf %181, %182 : vector<8x32xf32>
    %cst_117 = arith.constant 0.000000e+00 : f32
    %184 = vector.broadcast %cst_117 : f32 to vector<8x32xf32>
    %185 = arith.subf %184, %183 : vector<8x32xf32>
    %186 = math.exp %185 : vector<8x32xf32>
    %cst_118 = arith.constant 1.000000e+00 : f32
    %187 = vector.broadcast %cst_118 : f32 to vector<8x32xf32>
    %188 = arith.addf %187, %186 : vector<8x32xf32>
    %cst_119 = arith.constant 1.000000e+00 : f32
    %189 = vector.broadcast %cst_119 : f32 to vector<8x32xf32>
    %190 = arith.divf %189, %188 : vector<8x32xf32>
    %191 = arith.mulf %190, %180 : vector<8x32xf32>
    %192 = tpu.concatenate %180, %191 in 1 : vector<8x32xf32>, vector<8x32xf32> -> vector<8x64xf32>
    %cst_120 = arith.constant dense<0.000000e+00> : vector<16xf32>
    %193 = vector.multi_reduction <add>, %160, %cst_120 [1] : vector<16x8xf32> to vector<16xf32>
    %194 = vector.shape_cast %193 : vector<16xf32> to vector<16x1xf32>
    %cst_121 = arith.constant 1.000000e+00 : f32
    %195 = vector.broadcast %cst_121 : f32 to vector<16x1xf32>
    %196 = arith.subf %195, %194 : vector<16x1xf32>
    %197 = vector.broadcast %196 : vector<16x1xf32> to vector<16x64xf32>
    %198 = arith.mulf %156, %197 : vector<16x64xf32>
    %cst_122 = arith.constant dense<0.000000e+00> : vector<16x64xf32>
    %199 = tpu.matmul %160, %192, %cst_122 {dimension_numbers = #tpu.dot_dimension_numbers<[1], [0], [0], [1], [0, 0, 1, 1], [], []>} : vector<16x8xf32>, vector<8x64xf32>, vector<16x64xf32> -> vector<16x64xf32>
    %200 = arith.addf %198, %199 : vector<16x64xf32>
    %c0_123 = arith.constant 0 : index
    %c0_124 = arith.constant 0 : index
    %201 = vector.load %arg19[%c0_123, %c0_124] : memref<16x64xf32, #tpu.memory_space<vmem>>, vector<16x64xf32>
    tpu.vector_store %arg19[%c0_123, %c0_124], %200 {strides = array<i32>} : memref<16x64xf32, #tpu.memory_space<vmem>>, vector<16x64xf32>,
    %c0_125 = arith.constant 0 : index
    %c0_126 = arith.constant 0 : index
    %202 = vector.load %arg19[%c0_125, %c0_126] : memref<16x64xf32, #tpu.memory_space<vmem>>, vector<16x64xf32>
    %c0_127 = arith.constant 0 : index
    %c0_128 = arith.constant 0 : index
    %203 = vector.load %arg11[%c0_127, %c0_128] : memref<8x16xf32, #tpu.memory_space<vmem>>, vector<8x16xf32>
    %204 = vector.extract_strided_slice %202 {offsets = [0, 0], sizes = [16, 32], strides = [1, 1]} : vector<16x64xf32> to vector<16x32xf32>
    %cst_129 = arith.constant dense<0.000000e+00> : vector<8x32xf32>
    %205 = tpu.matmul %203, %204, %cst_129 {dimension_numbers = #tpu.dot_dimension_numbers<[1], [0], [0], [1], [0, 0, 1, 1], [], []>} : vector<8x16xf32>, vector<16x32xf32>, vector<8x32xf32> -> vector<8x32xf32>
    %c0_130 = arith.constant 0 : index
    %c0_131 = arith.constant 0 : index
    %206 = vector.load %arg12[%c0_130, %c0_131] : memref<8x32xf32, #tpu.memory_space<vmem>>, vector<8x32xf32>
    %c0_132 = arith.constant 0 : index
    %c0_133 = arith.constant 0 : index
    %207 = vector.load %arg13[%c0_132, %c0_133] : memref<32x32xf32, #tpu.memory_space<vmem>>, vector<32x32xf32>
    %cst_134 = arith.constant dense<0.000000e+00> : vector<8x32xf32>
    %208 = tpu.matmul %206, %207, %cst_134 {dimension_numbers = #tpu.dot_dimension_numbers<[1], [0], [0], [1], [0, 0, 1, 1], [], []>} : vector<8x32xf32>, vector<32x32xf32>, vector<8x32xf32> -> vector<8x32xf32>
    %c0_135 = arith.constant 0 : index
    %c0_136 = arith.constant 0 : index
    %209 = vector.load %arg14[%c0_135, %c0_136] : memref<32x32xf32, #tpu.memory_space<vmem>>, vector<32x32xf32>
    %cst_137 = arith.constant dense<0.000000e+00> : vector<8x32xf32>
    %210 = tpu.matmul %205, %209, %cst_137 {dimension_numbers = #tpu.dot_dimension_numbers<[1], [0], [0], [1], [0, 0, 1, 1], [], []>} : vector<8x32xf32>, vector<32x32xf32>, vector<8x32xf32> -> vector<8x32xf32>
    %211 = arith.addf %208, %210 : vector<8x32xf32>
    %c0_138 = arith.constant 0 : index
    %c0_139 = arith.constant 0 : index
    %212 = vector.load %arg15[%c0_138, %c0_139] : memref<1x32xf32, #tpu.memory_space<vmem>>, vector<1x32xf32>
    %213 = vector.broadcast %212 : vector<1x32xf32> to vector<8x32xf32>
    %214 = arith.addf %211, %213 : vector<8x32xf32>
    %cst_140 = arith.constant 0.000000e+00 : f32
    %215 = vector.broadcast %cst_140 : f32 to vector<8x32xf32>
    %216 = arith.maximumf %214, %215 : vector<8x32xf32>
    %c0_141 = arith.constant 0 : index
    %c0_142 = arith.constant 0 : index
    %217 = vector.load %arg16[%c0_141, %c0_142] : memref<8x32xf32, #tpu.memory_space<vmem>>, vector<8x32xf32>
    tpu.vector_store %arg16[%c0_141, %c0_142], %216 {strides = array<i32>} : memref<8x32xf32, #tpu.memory_space<vmem>>, vector<8x32xf32>,
    return
  }
  func.func @transform_0(%arg0: i32) -> (i32, i32) {
    %c0_i32 = arith.constant 0 : i32
    %c0_i32_0 = arith.constant 0 : i32
    %c0_i32_1 = arith.constant 0 : i32
    return %c0_i32, %c0_i32_0 : i32, i32
  }
  func.func @transform_1(%arg0: i32) -> (i32, i32) {
    %c0_i32 = arith.constant 0 : i32
    %c0_i32_0 = arith.constant 0 : i32
    %c0_i32_1 = arith.constant 0 : i32
    return %c0_i32, %c0_i32_0 : i32, i32
  }
  func.func @transform_2(%arg0: i32) -> (i32, i32, i32) {
    %c0_i32 = arith.constant 0 : i32
    %c0_i32_0 = arith.constant 0 : i32
    %c0_i32_1 = arith.constant 0 : i32
    %c0_i32_2 = arith.constant 0 : i32
    return %c0_i32, %c0_i32_0, %c0_i32_1 : i32, i32, i32
  }
  func.func @transform_3(%arg0: i32) -> (i32, i32, i32) {
    %c0_i32 = arith.constant 0 : i32
    %c0_i32_0 = arith.constant 0 : i32
    %c0_i32_1 = arith.constant 0 : i32
    %c0_i32_2 = arith.constant 0 : i32
    return %c0_i32, %c0_i32_0, %c0_i32_1 : i32, i32, i32
  }
  func.func @transform_4(%arg0: i32) -> (i32, i32) {
    %c0_i32 = arith.constant 0 : i32
    %c0_i32_0 = arith.constant 0 : i32
    %c0_i32_1 = arith.constant 0 : i32
    return %c0_i32, %c0_i32_0 : i32, i32
  }
  func.func @transform_5(%arg0: i32) -> (i32, i32) {
    %c0_i32 = arith.constant 0 : i32
    %c0_i32_0 = arith.constant 0 : i32
    %c0_i32_1 = arith.constant 0 : i32
    return %c0_i32, %c0_i32_0 : i32, i32
  }
  func.func @transform_6(%arg0: i32) -> (i32, i32) {
    %c0_i32 = arith.constant 0 : i32
    %c0_i32_0 = arith.constant 0 : i32
    %c0_i32_1 = arith.constant 0 : i32
    return %c0_i32, %c0_i32_0 : i32, i32
  }
  func.func @transform_7(%arg0: i32) -> (i32, i32) {
    %c0_i32 = arith.constant 0 : i32
    %c0_i32_0 = arith.constant 0 : i32
    %c0_i32_1 = arith.constant 0 : i32
    return %c0_i32, %c0_i32_0 : i32, i32
  }
  func.func @transform_8(%arg0: i32) -> (i32, i32) {
    %c0_i32 = arith.constant 0 : i32
    %c0_i32_0 = arith.constant 0 : i32
    %c0_i32_1 = arith.constant 0 : i32
    return %c0_i32, %c0_i32_0 : i32, i32
  }
  func.func @transform_9(%arg0: i32) -> (i32, i32) {
    %c0_i32 = arith.constant 0 : i32
    %c0_i32_0 = arith.constant 0 : i32
    %c0_i32_1 = arith.constant 0 : i32
    return %c0_i32, %c0_i32_0 : i32, i32
  }
  func.func @transform_10(%arg0: i32) -> (i32, i32) {
    %c0_i32 = arith.constant 0 : i32
    %c0_i32_0 = arith.constant 0 : i32
    %c0_i32_1 = arith.constant 0 : i32
    return %c0_i32, %c0_i32_0 : i32, i32
  }
  func.func @transform_11(%arg0: i32) -> (i32, i32) {
    %c0_i32 = arith.constant 0 : i32
    %c0_i32_0 = arith.constant 0 : i32
    %c0_i32_1 = arith.constant 0 : i32
    return %c0_i32, %c0_i32_0 : i32, i32
  }
  func.func @transform_12(%arg0: i32) -> (i32, i32) {
    %c0_i32 = arith.constant 0 : i32
    %c0_i32_0 = arith.constant 0 : i32
    %c0_i32_1 = arith.constant 0 : i32
    return %c0_i32, %c0_i32_0 : i32, i32
  }
  func.func @transform_13(%arg0: i32) -> (i32, i32) {
    %c0_i32 = arith.constant 0 : i32
    %c0_i32_0 = arith.constant 0 : i32
    %c0_i32_1 = arith.constant 0 : i32
    return %c0_i32, %c0_i32_0 : i32, i32
  }
  func.func @transform_14(%arg0: i32) -> (i32, i32) {
    %c0_i32 = arith.constant 0 : i32
    %c0_i32_0 = arith.constant 0 : i32
    %c0_i32_1 = arith.constant 0 : i32
    return %c0_i32, %c0_i32_0 : i32, i32
  }
  func.func @transform_15(%arg0: i32) -> (i32, i32) {
    %c0_i32 = arith.constant 0 : i32
    %c0_i32_0 = arith.constant 0 : i32
    %c0_i32_1 = arith.constant 0 : i32
    return %c0_i32, %c0_i32_0 : i32, i32
  }
}

</mosaic_0001>

<llo_original>
// kernel: tpu_custom_call.1
$region0: #{tpu_custom_call.1}
  #allocation0 [shape = 'u32[]', space=smem, size = 0x4, offset = 0x4, fixed_abs, tag = 'smem constant byte address 0x4 - core index']
  #allocation1 [shape = 'u32[144,128]{1,0:T(1,128)}', space=vmem, size = 0x12000, scoped, tag = 'internal scratch']
  #allocation2 [shape = 'f32[32,64]{1,0:T(8,128)}', space=vmem, size = 0x4000, scoped, tag = 'scratch operand']
  #allocation3 [shape = 'f32[32,32]{1,0:T(8,128)}', space=vmem, size = 0x4000, scoped, tag = 'scratch operand']
  #allocation4 [shape = 'f32[16,64]{1,0:T(8,128)}', space=vmem, size = 0x2000, scoped, tag = 'scratch operand']
  %s0 = inlined_call_operand.hbm [shape: f32[32,32], index: 0, kind: input, shape index: {}]
  %s1 = inlined_call_operand.hbm [shape: f32[32,32], index: 1, kind: input, shape index: {}]
  %s2 = inlined_call_operand.hbm [shape: f32[4,8,16], index: 2, kind: input, shape index: {}]
  %s3 = inlined_call_operand.hbm [shape: f32[4,16,8], index: 3, kind: input, shape index: {}]
  %s4 = inlined_call_operand.hbm [shape: f32[32,64], index: 4, kind: input, shape index: {}]
  %s5 = inlined_call_operand.hbm [shape: f32[64,64], index: 5, kind: input, shape index: {}]
  %s6 = inlined_call_operand.hbm [shape: f32[1,64], index: 6, kind: input, shape index: {}]
  %s7 = inlined_call_operand.hbm [shape: f32[32,32], index: 7, kind: input, shape index: {}]
  %s8 = inlined_call_operand.hbm [shape: f32[32,32], index: 8, kind: input, shape index: {}]
  %s9 = inlined_call_operand.hbm [shape: f32[1,32], index: 9, kind: input, shape index: {}]
  %s10 = inlined_call_operand.hbm [shape: f32[8,16], index: 10, kind: input, shape index: {}]
  %s11 = inlined_call_operand.hbm [shape: f32[8,32], index: 11, kind: input, shape index: {}]
  %s12 = inlined_call_operand.hbm [shape: f32[32,32], index: 12, kind: input, shape index: {}]
  %s13 = inlined_call_operand.hbm [shape: f32[32,32], index: 13, kind: input, shape index: {}]
  %s14 = inlined_call_operand.hbm [shape: f32[1,32], index: 14, kind: input, shape index: {}]
  %s15 = inlined_call_operand.hbm [shape: f32[8,32], index: 15, kind: output, shape index: {}]
  %s16 = sld [smem:[#allocation0]]
  $region130: #{tpu_custom_call.1} parent=0
    _
  %s18 = ssub.s32 1, %s16
  %s19 = scalar_select 0, %s18, %s16
  $region1: #{tpu_custom_call.1} parent=0
    #allocation5 [shape = 'u8[16384]{0}', space=vmem, size = 0x4000, scoped, tag = 'input window, operand 0, single buffered']
    #allocation6 [shape = 's32[1]{0}', space=sflag, size = 0x4, scoped, tag = 'scoped memory for tpu_custom_call.1']
    #allocation7 [shape = 's32[1]{0}', space=sflag, size = 0x4, scoped, tag = 'scoped memory for tpu_custom_call.1']
    #allocation8 [shape = 'u8[16384]{0}', space=vmem, size = 0x4000, scoped, tag = 'input window, operand 1, single buffered']
    #allocation9 [shape = 's32[1]{0}', space=sflag, size = 0x4, scoped, tag = 'scoped memory for tpu_custom_call.1']
    #allocation10 [shape = 'u8[16384]{0}', space=vmem, size = 0x4000, scoped, tag = 'input window, operand 2, single buffered']
    #allocation11 [shape = 'u8[32768]{0}', space=vmem, size = 0x8000, scoped, tag = 'input window, operand 3, single buffered']
    #allocation12 [shape = 's32[1]{0}', space=sflag, size = 0x4, scoped, tag = 'scoped memory for tpu_custom_call.1']
    #allocation13 [shape = 'u8[16384]{0}', space=vmem, size = 0x4000, scoped, tag = 'input window, operand 4, single buffered']
    #allocation14 [shape = 'u8[32768]{0}', space=vmem, size = 0x8000, scoped, tag = 'input window, operand 5, single buffered']
    #allocation15 [shape = 's32[1]{0}', space=sflag, size = 0x4, scoped, tag = 'scoped memory for tpu_custom_call.1']
    #allocation16 [shape = 'u8[512]{0}', space=vmem, size = 0x400, scoped, tag = 'input window, operand 6, single buffered']
    #allocation17 [shape = 'u8[16384]{0}', space=vmem, size = 0x4000, scoped, tag = 'input window, operand 7, single buffered']
    #allocation18 [shape = 's32[1]{0}', space=sflag, size = 0x4, scoped, tag = 'scoped memory for tpu_custom_call.1']
    #allocation19 [shape = 'u8[16384]{0}', space=vmem, size = 0x4000, scoped, tag = 'input window, operand 8, single buffered']
    #allocation20 [shape = 'u8[512]{0}', space=vmem, size = 0x400, scoped, tag = 'input window, operand 9, single buffered']
    #allocation21 [shape = 's32[1]{0}', space=sflag, size = 0x4, scoped, tag = 'scoped memory for tpu_custom_call.1']
    #allocation22 [shape = 'u8[4096]{0}', space=vmem, size = 0x1000, scoped, tag = 'input window, operand 10, single buffered']
    #allocation23 [shape = 'u8[4096]{0}', space=vmem, size = 0x1000, scoped, tag = 'input window, operand 11, single buffered']
    #allocation24 [shape = 's32[1]{0}', space=sflag, size = 0x4, scoped, tag = 'scoped memory for tpu_custom_call.1']
    #allocation25 [shape = 'u8[16384]{0}', space=vmem, size = 0x4000, scoped, tag = 'input window, operand 12, single buffered']
    #allocation26 [shape = 'u8[16384]{0}', space=vmem, size = 0x4000, scoped, tag = 'input window, operand 13, single buffered']
    #allocation27 [shape = 's32[1]{0}', space=sflag, size = 0x4, scoped, tag = 'scoped memory for tpu_custom_call.1']
    #allocation28 [shape = 'u8[512]{0}', space=vmem, size = 0x400, scoped, tag = 'input window, operand 14, single buffered']
    #allocation29 [shape = 'u8[4096]{0}', space=vmem, size = 0x1000, scoped, tag = 'output window, operand 0, single buffered']
    %20 = vsyncpa [#allocation6], 0
    %21 = vsyncpa [#allocation9], 0
    %22 = vsyncpa [#allocation12], 0
    %23 = vsyncpa [#allocation15], 0
    %24 = vsyncpa [#allocation18], 0
    %25 = vsyncpa [#allocation21], 0
    %26 = vsyncpa [#allocation24], 0
    %27 = vsyncpa [#allocation27], 0
    %28 = vsyncpa [#allocation7], 0
    // Predicated region
    $region2: #{tpu_custom_call.1} parent=1 // pred_check
      _
    $region3: #{tpu_custom_call.1} parent=1 // pred_check_branch
      %30 = sbr.rel (0) target = $region5
    $region4: #{tpu_custom_call.1} parent=1 // pred_region
      %s32 = ssub.s32 512, 512
      %33 = vsyncadd [#allocation6], %s32
      %s34 = sshll.u32 [#allocation5], 4
      %s35 = int_to_ptr.vmem [resolvable:$true] %s34
      %40 = dma.hbm_to_vmem [thread:$0]  %s0, 512, %s35, [#allocation6], 128, 128, 8
    $region5: #{tpu_custom_call.1} parent=1 // pred_fallthru
      _
    // Predicated region
    $region6: #{tpu_custom_call.1} parent=1 // pred_check
      _
    $region7: #{tpu_custom_call.1} parent=1 // pred_check_branch
      %42 = sbr.rel (0) target = $region9
    $region8: #{tpu_custom_call.1} parent=1 // pred_region
      %s44 = ssub.s32 512, 512
      %45 = vsyncadd [#allocation9], %s44
      %s46 = sshll.u32 [#allocation8], 4
      %s47 = int_to_ptr.vmem [resolvable:$true] %s46
      %52 = dma.hbm_to_vmem [thread:$0]  %s1, 512, %s47, [#allocation9], 128, 128, 8
    $region9: #{tpu_custom_call.1} parent=1 // pred_fallthru
      _
    // Predicated region
    $region10: #{tpu_custom_call.1} parent=1 // pred_check
      _
    $region11: #{tpu_custom_call.1} parent=1 // pred_check_branch
      %54 = sbr.rel (0) target = $region13
    $region12: #{tpu_custom_call.1} parent=1 // pred_region
      %s56 = ssub.s32 512, 512
      %57 = vsyncadd [#allocation9], %s56
      %s58 = sshll.u32 [#allocation10], 4
      %s59 = int_to_ptr.vmem [resolvable:$true] %s58
      %64 = dma.hbm_to_vmem [thread:$0]  %s2, 512, %s59, [#allocation9], 128, 128, 8
    $region13: #{tpu_custom_call.1} parent=1 // pred_fallthru
      _
    // Predicated region
    $region14: #{tpu_custom_call.1} parent=1 // pred_check
      _
    $region15: #{tpu_custom_call.1} parent=1 // pred_check_branch
      %66 = sbr.rel (0) target = $region17
    $region16: #{tpu_custom_call.1} parent=1 // pred_region
      %s68 = ssub.s32 1024, 1024
      %69 = vsyncadd [#allocation12], %s68
      %s70 = sshll.u32 [#allocation11], 4
      %s71 = int_to_ptr.vmem [resolvable:$true] %s70
      %76 = dma.hbm_to_vmem [thread:$0]  %s3, 1024, %s71, [#allocation12], 128, 128, 8
    $region17: #{tpu_custom_call.1} parent=1 // pred_fallthru
      _
    // Predicated region
    $region18: #{tpu_custom_call.1} parent=1 // pred_check
      _
    $region19: #{tpu_custom_call.1} parent=1 // pred_check_branch
      %78 = sbr.rel (0) target = $region21
    $region20: #{tpu_custom_call.1} parent=1 // pred_region
      %s80 = ssub.s32 512, 512
      %81 = vsyncadd [#allocation12], %s80
      %s82 = sshll.u32 [#allocation13], 4
      %s83 = int_to_ptr.vmem [resolvable:$true] %s82
      %88 = dma.hbm_to_vmem [thread:$0]  %s4, 512, %s83, [#allocation12], 128, 128, 8
    $region21: #{tpu_custom_call.1} parent=1 // pred_fallthru
      _
    // Predicated region
    $region22: #{tpu_custom_call.1} parent=1 // pred_check
      _
    $region23: #{tpu_custom_call.1} parent=1 // pred_check_branch
      %90 = sbr.rel (0) target = $region25
    $region24: #{tpu_custom_call.1} parent=1 // pred_region
      %s92 = ssub.s32 1024, 1024
      %93 = vsyncadd [#allocation15], %s92
      %s94 = sshll.u32 [#allocation14], 4
      %s95 = int_to_ptr.vmem [resolvable:$true] %s94
      %100 = dma.hbm_to_vmem [thread:$0]  %s5, 1024, %s95, [#allocation15], 128, 128, 8
    $region25: #{tpu_custom_call.1} parent=1 // pred_fallthru
      _
    // Predicated region
    $region26: #{tpu_custom_call.1} parent=1 // pred_check
      _
    $region27: #{tpu_custom_call.1} parent=1 // pred_check_branch
      %102 = sbr.rel (0) target = $region29
    $region28: #{tpu_custom_call.1} parent=1 // pred_region
      %s104 = ssub.s32 16, 16
      %105 = vsyncadd [#allocation15], %s104
      %s107 = sshll.u32 [#allocation16], 4
      %s108 = int_to_ptr.vmem [resolvable:$true] %s107
      %110 = dma.hbm_to_vmem [thread:$0]  %s6, 16, %s108, [#allocation15]
    $region29: #{tpu_custom_call.1} parent=1 // pred_fallthru
      _
    // Predicated region
    $region30: #{tpu_custom_call.1} parent=1 // pred_check
      _
    $region31: #{tpu_custom_call.1} parent=1 // pred_check_branch
      %112 = sbr.rel (0) target = $region33
    $region32: #{tpu_custom_call.1} parent=1 // pred_region
      %s114 = ssub.s32 512, 512
      %115 = vsyncadd [#allocation18], %s114
      %s116 = sshll.u32 [#allocation17], 4
      %s117 = int_to_ptr.vmem [resolvable:$true] %s116
      %122 = dma.hbm_to_vmem [thread:$0]  %s7, 512, %s117, [#allocation18], 128, 128, 8
    $region33: #{tpu_custom_call.1} parent=1 // pred_fallthru
      _
    // Predicated region
    $region34: #{tpu_custom_call.1} parent=1 // pred_check
      _
    $region35: #{tpu_custom_call.1} parent=1 // pred_check_branch
      %124 = sbr.rel (0) target = $region37
    $region36: #{tpu_custom_call.1} parent=1 // pred_region
      %s126 = ssub.s32 512, 512
      %127 = vsyncadd [#allocation18], %s126
      %s128 = sshll.u32 [#allocation19], 4
      %s129 = int_to_ptr.vmem [resolvable:$true] %s128
      %134 = dma.hbm_to_vmem [thread:$0]  %s8, 512, %s129, [#allocation18], 128, 128, 8
    $region37: #{tpu_custom_call.1} parent=1 // pred_fallthru
      _
    // Predicated region
    $region38: #{tpu_custom_call.1} parent=1 // pred_check
      _
    $region39: #{tpu_custom_call.1} parent=1 // pred_check_branch
      %136 = sbr.rel (0) target = $region41
    $region40: #{tpu_custom_call.1} parent=1 // pred_region
      %s138 = ssub.s32 16, 16
      %139 = vsyncadd [#allocation21], %s138
      %s141 = sshll.u32 [#allocation20], 4
      %s142 = int_to_ptr.vmem [resolvable:$true] %s141
      %144 = dma.hbm_to_vmem [thread:$0]  %s9, 16, %s142, [#allocation21]
    $region41: #{tpu_custom_call.1} parent=1 // pred_fallthru
      _
    // Predicated region
    $region42: #{tpu_custom_call.1} parent=1 // pred_check
      _
    $region43: #{tpu_custom_call.1} parent=1 // pred_check_branch
      %146 = sbr.rel (0) target = $region45
    $region44: #{tpu_custom_call.1} parent=1 // pred_region
      %s148 = ssub.s32 128, 128
      %149 = vsyncadd [#allocation21], %s148
      %s151 = sshll.u32 [#allocation22], 4
      %s152 = int_to_ptr.vmem [resolvable:$true] %s151
      %154 = dma.hbm_to_vmem [thread:$0]  %s10, 128, %s152, [#allocation21]
    $region45: #{tpu_custom_call.1} parent=1 // pred_fallthru
      _
    // Predicated region
    $region46: #{tpu_custom_call.1} parent=1 // pred_check
      _
    $region47: #{tpu_custom_call.1} parent=1 // pred_check_branch
      %156 = sbr.rel (0) target = $region49
    $region48: #{tpu_custom_call.1} parent=1 // pred_region
      %s158 = ssub.s32 128, 128
      %159 = vsyncadd [#allocation24], %s158
      %s161 = sshll.u32 [#allocation23], 4
      %s162 = int_to_ptr.vmem [resolvable:$true] %s161
      %164 = dma.hbm_to_vmem [thread:$0]  %s11, 128, %s162, [#allocation24]
    $region49: #{tpu_custom_call.1} parent=1 // pred_fallthru
      _
    // Predicated region
    $region50: #{tpu_custom_call.1} parent=1 // pred_check
      _
    $region51: #{tpu_custom_call.1} parent=1 // pred_check_branch
      %166 = sbr.rel (0) target = $region53
    $region52: #{tpu_custom_call.1} parent=1 // pred_region
      %s168 = ssub.s32 512, 512
      %169 = vsyncadd [#allocation24], %s168
      %s170 = sshll.u32 [#allocation25], 4
      %s171 = int_to_ptr.vmem [resolvable:$true] %s170
      %176 = dma.hbm_to_vmem [thread:$0]  %s12, 512, %s171, [#allocation24], 128, 128, 8
    $region53: #{tpu_custom_call.1} parent=1 // pred_fallthru
      _
    // Predicated region
    $region54: #{tpu_custom_call.1} parent=1 // pred_check
      _
    $region55: #{tpu_custom_call.1} parent=1 // pred_check_branch
      %178 = sbr.rel (0) target = $region57
    $region56: #{tpu_custom_call.1} parent=1 // pred_region
      %s180 = ssub.s32 512, 512
      %181 = vsyncadd [#allocation27], %s180
      %s182 = sshll.u32 [#allocation26], 4
      %s183 = int_to_ptr.vmem [resolvable:$true] %s182
      %188 = dma.hbm_to_vmem [thread:$0]  %s13, 512, %s183, [#allocation27], 128, 128, 8
    $region57: #{tpu_custom_call.1} parent=1 // pred_fallthru
      _
    // Predicated region
    $region58: #{tpu_custom_call.1} parent=1 // pred_check
      _
    $region59: #{tpu_custom_call.1} parent=1 // pred_check_branch
      %190 = sbr.rel (0) target = $region61
    $region60: #{tpu_custom_call.1} parent=1 // pred_region
      %s192 = ssub.s32 16, 16
      %193 = vsyncadd [#allocation27], %s192
      %s195 = sshll.u32 [#allocation28], 4
      %s196 = int_to_ptr.vmem [resolvable:$true] %s195
      %198 = dma.hbm_to_vmem [thread:$0]  %s14, 16, %s196, [#allocation27]
    $region61: #{tpu_custom_call.1} parent=1 // pred_fallthru
      _
    // Predicated region
    $region62: #{tpu_custom_call.1} parent=1 // pred_check
      _
    $region63: #{tpu_custom_call.1} parent=1 // pred_check_branch
      %200 = sbr.rel (0) target = $region65
    $region64: #{tpu_custom_call.1} parent=1 // pred_region
      %201 = dma.done [#allocation6], 512
    $region65: #{tpu_custom_call.1} parent=1 // pred_fallthru
      _
    // Predicated region
    $region66: #{tpu_custom_call.1} parent=1 // pred_check
      _
    $region67: #{tpu_custom_call.1} parent=1 // pred_check_branch
      %203 = sbr.rel (0) target = $region69
    $region68: #{tpu_custom_call.1} parent=1 // pred_region
      %204 = dma.done [#allocation9], 512
    $region69: #{tpu_custom_call.1} parent=1 // pred_fallthru
      _
    // Predicated region
    $region70: #{tpu_custom_call.1} parent=1 // pred_check
      _
    $region71: #{tpu_custom_call.1} parent=1 // pred_check_branch
      %206 = sbr.rel (0) target = $region73
    $region72: #{tpu_custom_call.1} parent=1 // pred_region
      %207 = dma.done [#allocation9], 512
    $region73: #{tpu_custom_call.1} parent=1 // pred_fallthru
      _
    // Predicated region
    $region74: #{tpu_custom_call.1} parent=1 // pred_check
      _
    $region75: #{tpu_custom_call.1} parent=1 // pred_check_branch
      %209 = sbr.rel (0) target = $region77
    $region76: #{tpu_custom_call.1} parent=1 // pred_region
      %210 = dma.done [#allocation12], 1024
    $region77: #{tpu_custom_call.1} parent=1 // pred_fallthru
      _
    // Predicated region
    $region78: #{tpu_custom_call.1} parent=1 // pred_check
      _
    $region79: #{tpu_custom_call.1} parent=1 // pred_check_branch
      %212 = sbr.rel (0) target = $region81
    $region80: #{tpu_custom_call.1} parent=1 // pred_region
      %213 = dma.done [#allocation12], 512
    $region81: #{tpu_custom_call.1} parent=1 // pred_fallthru
      _
    // Predicated region
    $region82: #{tpu_custom_call.1} parent=1 // pred_check
      _
    $region83: #{tpu_custom_call.1} parent=1 // pred_check_branch
      %215 = sbr.rel (0) target = $region85
    $region84: #{tpu_custom_call.1} parent=1 // pred_region
      %216 = dma.done [#allocation15], 1024
    $region85: #{tpu_custom_call.1} parent=1 // pred_fallthru
      _
    // Predicated region
    $region86: #{tpu_custom_call.1} parent=1 // pred_check
      _
    $region87: #{tpu_custom_call.1} parent=1 // pred_check_branch
      %218 = sbr.rel (0) target = $region89
    $region88: #{tpu_custom_call.1} parent=1 // pred_region
      %219 = dma.done [#allocation15], 16
    $region89: #{tpu_custom_call.1} parent=1 // pred_fallthru
      _
    // Predicated region
    $region90: #{tpu_custom_call.1} parent=1 // pred_check
      _
    $region91: #{tpu_custom_call.1} parent=1 // pred_check_branch
      %221 = sbr.rel (0) target = $region93
    $region92: #{tpu_custom_call.1} parent=1 // pred_region
      %222 = dma.done [#allocation18], 512
    $region93: #{tpu_custom_call.1} parent=1 // pred_fallthru
      _
    // Predicated region
    $region94: #{tpu_custom_call.1} parent=1 // pred_check
      _
    $region95: #{tpu_custom_call.1} parent=1 // pred_check_branch
      %224 = sbr.rel (0) target = $region97
    $region96: #{tpu_custom_call.1} parent=1 // pred_region
      %225 = dma.done [#allocation18], 512
    $region97: #{tpu_custom_call.1} parent=1 // pred_fallthru
      _
    // Predicated region
    $region98: #{tpu_custom_call.1} parent=1 // pred_check
      _
    $region99: #{tpu_custom_call.1} parent=1 // pred_check_branch
      %227 = sbr.rel (0) target = $region101
    $region100: #{tpu_custom_call.1} parent=1 // pred_region
      %228 = dma.done [#allocation21], 16
    $region101: #{tpu_custom_call.1} parent=1 // pred_fallthru
      _
    // Predicated region
    $region102: #{tpu_custom_call.1} parent=1 // pred_check
      _
    $region103: #{tpu_custom_call.1} parent=1 // pred_check_branch
      %230 = sbr.rel (0) target = $region105
    $region104: #{tpu_custom_call.1} parent=1 // pred_region
      %231 = dma.done [#allocation21], 128
    $region105: #{tpu_custom_call.1} parent=1 // pred_fallthru
      _
    // Predicated region
    $region106: #{tpu_custom_call.1} parent=1 // pred_check
      _
    $region107: #{tpu_custom_call.1} parent=1 // pred_check_branch
      %233 = sbr.rel (0) target = $region109
    $region108: #{tpu_custom_call.1} parent=1 // pred_region
      %234 = dma.done [#allocation24], 128
    $region109: #{tpu_custom_call.1} parent=1 // pred_fallthru
      _
    // Predicated region
    $region110: #{tpu_custom_call.1} parent=1 // pred_check
      _
    $region111: #{tpu_custom_call.1} parent=1 // pred_check_branch
      %236 = sbr.rel (0) target = $region113
    $region112: #{tpu_custom_call.1} parent=1 // pred_region
      %237 = dma.done [#allocation24], 512
    $region113: #{tpu_custom_call.1} parent=1 // pred_fallthru
      _
    // Predicated region
    $region114: #{tpu_custom_call.1} parent=1 // pred_check
      _
    $region115: #{tpu_custom_call.1} parent=1 // pred_check_branch
      %239 = sbr.rel (0) target = $region117
    $region116: #{tpu_custom_call.1} parent=1 // pred_region
      %240 = dma.done [#allocation27], 512
    $region117: #{tpu_custom_call.1} parent=1 // pred_fallthru
      _
    // Predicated region
    $region118: #{tpu_custom_call.1} parent=1 // pred_check
      _
    $region119: #{tpu_custom_call.1} parent=1 // pred_check_branch
      %242 = sbr.rel (0) target = $region121
    $region120: #{tpu_custom_call.1} parent=1 // pred_region
      %243 = dma.done [#allocation27], 16
    $region121: #{tpu_custom_call.1} parent=1 // pred_fallthru
      _
    %vm244 = vcmask 523264
    %245 = vst.msk [vmem:[#allocation4] sm:$0xff] %vm244, 0.0
    %246 = vst.msk [vmem:[#allocation4 + $0x8] sm:$0xff] %vm244, 0.0
    %v247 = vld [vmem:[#allocation5] sm:$0xff]
    %v248 = vld [vmem:[#allocation5 + $0x8] sm:$0xff]
    %v249 = vld [vmem:[#allocation5 + $0x10] sm:$0xff]
    %v250 = vld [vmem:[#allocation5 + $0x18] sm:$0xff]
    %v251 = vld [vmem:[#allocation13] sm:$0xff]
    %v252 = vld [vmem:[#allocation13 + $0x8] sm:$0xff]
    %v253 = vld [vmem:[#allocation13 + $0x10] sm:$0xff]
    %v254 = vld [vmem:[#allocation13 + $0x18] sm:$0xff]
    %v255 = vld [vmem:[#allocation16] sm:$0x1]
    %v257 = vlaneseq
    %v258 = vshrl.u32 %v257, 7
    %v259 = vsub.s32 0, %v258
    %v260 = vrot.slane %v255, %v259
    %vm262 = vcmask 261120
    %v264 = vsel %vm262, %v247, 0
    %v267 = vsel %vm262, %v248, 0
    %v270 = vsel %vm262, %v249, 0
    %v273 = vsel %vm262, %v250, 0
    %275 = vmatprep.subr.mxu0 0.0
    %276 = vmatpush1.msra.mxu0 %v251
    %277 = vmatprep.subr.mxu0 0.0
    %278 = vmatpush1.msra.mxu0 %v252
    %279 = vmatprep.subr.mxu0 0.0
    %280 = vmatpush1.msra.mxu0 %v253
    %281 = vmatprep.subr.mxu0 0.0
    %282 = vmatpush1.msra.mxu0 %v254
    %283 = vmatprep.subr.mxu0 0.0
    %284 = vmatpush1.msra.mxu0 0.0
    %285 = vmatprep.subr.mxu0 0.0
    %286 = vmatpush1.msra.mxu0 0.0
    %287 = vmatprep.subr.mxu0 0.0
    %288 = vmatpush1.msra.mxu0 0.0
    %289 = vmatprep.subr.mxu0 0.0
    %290 = vmatpush1.msra.mxu0 0.0
    %291 = vmatprep.subr.mxu0 0.0
    %292 = vmatpush1.msra.mxu0 0.0
    %293 = vmatprep.subr.mxu0 0.0
    %294 = vmatpush1.msra.mxu0 0.0
    %295 = vmatprep.subr.mxu0 0.0
    %296 = vmatpush1.msra.mxu0 0.0
    %297 = vmatprep.subr.mxu0 0.0
    %298 = vmatpush1.msra.mxu0 0.0
    %299 = vmatprep.subr.mxu0 0.0
    %300 = vmatpush1.msra.mxu0 0.0
    %301 = vmatprep.subr.mxu0 0.0
    %302 = vmatpush1.msra.mxu0 0.0
    %303 = vmatprep.subr.mxu0 0.0
    %304 = vmatpush1.msra.mxu0 0.0
    %305 = vmatprep.subr.mxu0 0.0
    %306 = vmatpush1.msra.mxu0 0.0
    %307 = vmatprep.subr.mxu0 0.0
    %308 = vmatpush1.msra.mxu0 0.0
    %309 = vmatprep.subr.mxu0 0.0
    %310 = vmatpush1.msra.mxu0 0.0
    %311 = vmatprep.subr.mxu0 0.0
    %312 = vmatpush1.msra.mxu0 0.0
    %313 = vmatprep.subr.mxu0 0.0
    %314 = vmatpush1.msra.mxu0 0.0
    %315 = vmatprep.subr.mxu0 0.0
    %316 = vmatpush1.msra.mxu0 0.0
    %317 = vmatprep.subr.mxu0 0.0
    %318 = vmatpush1.msra.mxu0 0.0
    %319 = vmatprep.subr.mxu0 0.0
    %320 = vmatpush1.msra.mxu0 0.0
    %321 = vmatprep.subr.mxu0 0.0
    %322 = vmatpush1.msra.mxu0 0.0
    %323 = vmatprep.subr.mxu0 0.0
    %324 = vmatpush1.msra.mxu0 0.0
    %325 = vmatprep.subr.mxu0 0.0
    %326 = vmatpush1.msra.mxu0 0.0
    %327 = vmatprep.subr.mxu0 0.0
    %328 = vmatpush1.msra.mxu0 0.0
    %329 = vmatprep.subr.mxu0 0.0
    %330 = vmatpush1.msra.mxu0 0.0
    %331 = vmatprep.subr.mxu0 0.0
    %332 = vmatpush1.msra.mxu0 0.0
    %333 = vmatprep.subr.mxu0 0.0
    %334 = vmatpush1.msra.mxu0 0.0
    %335 = vmatprep.subr.mxu0 0.0
    %336 = vmatpush1.msra.mxu0 0.0
    %337 = vmatprep.subr.mxu0 0.0
    %338 = vmatpush1.msra.mxu0 0.0
    %339 = vmatprep.mubr.f32.mxu0 0.0
    %340 = vmatmul.mubr.f32.gmra.mrb[0].mxu0 %v264
    %v341 = vpop.f32.mrb[0].mxu0
    %v342 = vadd.f32 %v260, %v341
    %v343 = vpop.f32.mrb[0].mxu0
    %344 = vmatprep.mubr.f32.mxu0 0.0
    %345 = vmatmul.mubr.f32.gmra.mrb[0].mxu0 %v267
    %v346 = vpop.f32.mrb[0].mxu0
    %v347 = vadd.f32 %v260, %v346
    %v348 = vpop.f32.mrb[0].mxu0
    %349 = vmatprep.mubr.f32.mxu0 0.0
    %350 = vmatmul.mubr.f32.gmra.mrb[0].mxu0 %v270
    %v351 = vpop.f32.mrb[0].mxu0
    %v352 = vadd.f32 %v260, %v351
    %v353 = vpop.f32.mrb[0].mxu0
    %354 = vmatprep.mubr.f32.mxu0 0.0
    %355 = vmatmul.mubr.f32.gmra.mrb[0].mxu0 %v273
    %v356 = vpop.f32.mrb[0].mxu0
    %v357 = vadd.f32 %v260, %v356
    %v358 = vpop.f32.mrb[0].mxu0
    %359 = vdwg.mxu0
    %360 = vst.msk [vmem:[#allocation2] sm:$0xff] %vm244, %v342
    %361 = vst.msk [vmem:[#allocation2 + $0x8] sm:$0xff] %vm244, %v347
    %362 = vst.msk [vmem:[#allocation2 + $0x10] sm:$0xff] %vm244, %v352
    %363 = vst.msk [vmem:[#allocation2 + $0x18] sm:$0xff] %vm244, %v357
    %v364 = vld [vmem:[#allocation8] sm:$0xff]
    %v365 = vld [vmem:[#allocation8 + $0x8] sm:$0xff]
    %v366 = vld [vmem:[#allocation8 + $0x10] sm:$0xff]
    %v367 = vld [vmem:[#allocation8 + $0x18] sm:$0xff]
    %v368 = vld [vmem:[#allocation17] sm:$0xff]
    %v369 = vld [vmem:[#allocation17 + $0x8] sm:$0xff]
    %v370 = vld [vmem:[#allocation17 + $0x10] sm:$0xff]
    %v371 = vld [vmem:[#allocation17 + $0x18] sm:$0xff]
    %v372 = vld [vmem:[#allocation20] sm:$0x1]
    %v374 = vlaneseq
    %v375 = vshrl.u32 %v374, 7
    %v376 = vsub.s32 0, %v375
    %v377 = vrot.slane %v372, %v376
    %v380 = vsel %vm262, %v364, 0
    %v383 = vsel %vm262, %v365, 0
    %v386 = vsel %vm262, %v366, 0
    %v389 = vsel %vm262, %v367, 0
    %391 = vmatprep.subr.mxu0 0.0
    %392 = vmatpush1.msra.mxu0 %v368
    %393 = vmatprep.subr.mxu0 0.0
    %394 = vmatpush1.msra.mxu0 %v369
    %395 = vmatprep.subr.mxu0 0.0
    %396 = vmatpush1.msra.mxu0 %v370
    %397 = vmatprep.subr.mxu0 0.0
    %398 = vmatpush1.msra.mxu0 %v371
    %399 = vmatprep.subr.mxu0 0.0
    %400 = vmatpush1.msra.mxu0 0.0
    %401 = vmatprep.subr.mxu0 0.0
    %402 = vmatpush1.msra.mxu0 0.0
    %403 = vmatprep.subr.mxu0 0.0
    %404 = vmatpush1.msra.mxu0 0.0
    %405 = vmatprep.subr.mxu0 0.0
    %406 = vmatpush1.msra.mxu0 0.0
    %407 = vmatprep.subr.mxu0 0.0
    %408 = vmatpush1.msra.mxu0 0.0
    %409 = vmatprep.subr.mxu0 0.0
    %410 = vmatpush1.msra.mxu0 0.0
    %411 = vmatprep.subr.mxu0 0.0
    %412 = vmatpush1.msra.mxu0 0.0
    %413 = vmatprep.subr.mxu0 0.0
    %414 = vmatpush1.msra.mxu0 0.0
    %415 = vmatprep.subr.mxu0 0.0
    %416 = vmatpush1.msra.mxu0 0.0
    %417 = vmatprep.subr.mxu0 0.0
    %418 = vmatpush1.msra.mxu0 0.0
    %419 = vmatprep.subr.mxu0 0.0
    %420 = vmatpush1.msra.mxu0 0.0
    %421 = vmatprep.subr.mxu0 0.0
    %422 = vmatpush1.msra.mxu0 0.0
    %423 = vmatprep.subr.mxu0 0.0
    %424 = vmatpush1.msra.mxu0 0.0
    %425 = vmatprep.subr.mxu0 0.0
    %426 = vmatpush1.msra.mxu0 0.0
    %427 = vmatprep.subr.mxu0 0.0
    %428 = vmatpush1.msra.mxu0 0.0
    %429 = vmatprep.subr.mxu0 0.0
    %430 = vmatpush1.msra.mxu0 0.0
    %431 = vmatprep.subr.mxu0 0.0
    %432 = vmatpush1.msra.mxu0 0.0
    %433 = vmatprep.subr.mxu0 0.0
    %434 = vmatpush1.msra.mxu0 0.0
    %435 = vmatprep.subr.mxu0 0.0
    %436 = vmatpush1.msra.mxu0 0.0
    %437 = vmatprep.subr.mxu0 0.0
    %438 = vmatpush1.msra.mxu0 0.0
    %439 = vmatprep.subr.mxu0 0.0
    %440 = vmatpush1.msra.mxu0 0.0
    %441 = vmatprep.subr.mxu0 0.0
    %442 = vmatpush1.msra.mxu0 0.0
    %443 = vmatprep.subr.mxu0 0.0
    %444 = vmatpush1.msra.mxu0 0.0
    %445 = vmatprep.subr.mxu0 0.0
    %446 = vmatpush1.msra.mxu0 0.0
    %447 = vmatprep.subr.mxu0 0.0
    %448 = vmatpush1.msra.mxu0 0.0
    %449 = vmatprep.subr.mxu0 0.0
    %450 = vmatpush1.msra.mxu0 0.0
    %451 = vmatprep.subr.mxu0 0.0
    %452 = vmatpush1.msra.mxu0 0.0
    %453 = vmatprep.subr.mxu0 0.0
    %454 = vmatpush1.msra.mxu0 0.0
    %455 = vmatprep.mubr.f32.mxu0 0.0
    %456 = vmatmul.mubr.f32.gmra.mrb[0].mxu0 %v380
    %v457 = vpop.f32.mrb[0].mxu0
    %v458 = vadd.f32 %v377, %v457
    %v459 = vpop.f32.mrb[0].mxu0
    %460 = vmatprep.mubr.f32.mxu0 0.0
    %461 = vmatmul.mubr.f32.gmra.mrb[0].mxu0 %v383
    %v462 = vpop.f32.mrb[0].mxu0
    %v463 = vadd.f32 %v377, %v462
    %v464 = vpop.f32.mrb[0].mxu0
    %465 = vmatprep.mubr.f32.mxu0 0.0
    %466 = vmatmul.mubr.f32.gmra.mrb[0].mxu0 %v386
    %v467 = vpop.f32.mrb[0].mxu0
    %v468 = vadd.f32 %v377, %v467
    %v469 = vpop.f32.mrb[0].mxu0
    %470 = vmatprep.mubr.f32.mxu0 0.0
    %471 = vmatmul.mubr.f32.gmra.mrb[0].mxu0 %v389
    %v472 = vpop.f32.mrb[0].mxu0
    %v473 = vadd.f32 %v377, %v472
    %v474 = vpop.f32.mrb[0].mxu0
    %475 = vdwg.mxu0
    %476 = vst.msk [vmem:[#allocation3] sm:$0xff] %vm262, %v458
    %477 = vst.msk [vmem:[#allocation3 + $0x8] sm:$0xff] %vm262, %v463
    %478 = vst.msk [vmem:[#allocation3 + $0x10] sm:$0xff] %vm262, %v468
    %479 = vst.msk [vmem:[#allocation3 + $0x18] sm:$0xff] %vm262, %v473
    %v480 = vld [vmem:[#allocation14] sm:$0xff]
    %v481 = vld [vmem:[#allocation14 + $0x8] sm:$0xff]
    %v482 = vld [vmem:[#allocation14 + $0x10] sm:$0xff]
    %v483 = vld [vmem:[#allocation14 + $0x18] sm:$0xff]
    %v484 = vld [vmem:[#allocation14 + $0x20] sm:$0xff]
    %v485 = vld [vmem:[#allocation14 + $0x28] sm:$0xff]
    %v486 = vld [vmem:[#allocation14 + $0x30] sm:$0xff]
    %v487 = vld [vmem:[#allocation14 + $0x38] sm:$0xff]
    %v488 = vld [vmem:[#allocation19] sm:$0xff]
    %v489 = vld [vmem:[#allocation19 + $0x8] sm:$0xff]
    %v490 = vld [vmem:[#allocation19 + $0x10] sm:$0xff]
    %v491 = vld [vmem:[#allocation19 + $0x18] sm:$0xff]
    %v492 = vld [vmem:[#allocation4] sm:$0xff]
    %v493 = vld [vmem:[#allocation4 + $0x8] sm:$0xff]
    %v494 = vld [vmem:[#allocation10] sm:$0xff]
    %v495 = vld [vmem:[#allocation11] sm:$0xff]
    %v496 = vld [vmem:[#allocation11 + $0x8] sm:$0xff]
    %vm497 = vcmask 130048
    %v499 = vsel %vm497, %v494, 0
    %501 = vmatprep.subr.mxu0 0.0
    %502 = vmatpush1.msra.mxu0 %v492
    %503 = vmatprep.subr.mxu0 0.0
    %504 = vmatpush1.msra.mxu0 %v493
    %505 = vmatprep.subr.mxu0 0.0
    %506 = vmatpush1.msra.mxu0 0.0
    %507 = vmatprep.subr.mxu0 0.0
    %508 = vmatpush1.msra.mxu0 0.0
    %509 = vmatprep.subr.mxu0 0.0
    %510 = vmatpush1.msra.mxu0 0.0
    %511 = vmatprep.subr.mxu0 0.0
    %512 = vmatpush1.msra.mxu0 0.0
    %513 = vmatprep.subr.mxu0 0.0
    %514 = vmatpush1.msra.mxu0 0.0
    %515 = vmatprep.subr.mxu0 0.0
    %516 = vmatpush1.msra.mxu0 0.0
    %517 = vmatprep.subr.mxu0 0.0
    %518 = vmatpush1.msra.mxu0 0.0
    %519 = vmatprep.subr.mxu0 0.0
    %520 = vmatpush1.msra.mxu0 0.0
    %521 = vmatprep.subr.mxu0 0.0
    %522 = vmatpush1.msra.mxu0 0.0
    %523 = vmatprep.subr.mxu0 0.0
    %524 = vmatpush1.msra.mxu0 0.0
    %525 = vmatprep.subr.mxu0 0.0
    %526 = vmatpush1.msra.mxu0 0.0
    %527 = vmatprep.subr.mxu0 0.0
    %528 = vmatpush1.msra.mxu0 0.0
    %529 = vmatprep.subr.mxu0 0.0
    %530 = vmatpush1.msra.mxu0 0.0
    %531 = vmatprep.subr.mxu0 0.0
    %532 = vmatpush1.msra.mxu0 0.0
    %533 = vmatprep.subr.mxu0 0.0
    %534 = vmatpush1.msra.mxu0 0.0
    %535 = vmatprep.subr.mxu0 0.0
    %536 = vmatpush1.msra.mxu0 0.0
    %537 = vmatprep.subr.mxu0 0.0
    %538 = vmatpush1.msra.mxu0 0.0
    %539 = vmatprep.subr.mxu0 0.0
    %540 = vmatpush1.msra.mxu0 0.0
    %541 = vmatprep.subr.mxu0 0.0
    %542 = vmatpush1.msra.mxu0 0.0
    %543 = vmatprep.subr.mxu0 0.0
    %544 = vmatpush1.msra.mxu0 0.0
    %545 = vmatprep.subr.mxu0 0.0
    %546 = vmatpush1.msra.mxu0 0.0
    %547 = vmatprep.subr.mxu0 0.0
    %548 = vmatpush1.msra.mxu0 0.0
    %549 = vmatprep.subr.mxu0 0.0
    %550 = vmatpush1.msra.mxu0 0.0
    %551 = vmatprep.subr.mxu0 0.0
    %552 = vmatpush1.msra.mxu0 0.0
    %553 = vmatprep.subr.mxu0 0.0
    %554 = vmatpush1.msra.mxu0 0.0
    %555 = vmatprep.subr.mxu0 0.0
    %556 = vmatpush1.msra.mxu0 0.0
    %557 = vmatprep.subr.mxu0 0.0
    %558 = vmatpush1.msra.mxu0 0.0
    %559 = vmatprep.subr.mxu0 0.0
    %560 = vmatpush1.msra.mxu0 0.0
    %561 = vmatprep.subr.mxu0 0.0
    %562 = vmatpush1.msra.mxu0 0.0
    %563 = vmatprep.subr.mxu0 0.0
    %564 = vmatpush1.msra.mxu0 0.0
    %565 = vmatprep.mubr.f32.mxu0 0.0
    %566 = vmatmul.mubr.f32.gmra.mrb[0].mxu0 %v499
    %v567 = vpop.f32.mrb[0].mxu0
    %v568 = vadd.f32 0.0, %v567
    %v569 = vpop.f32.mrb[0].mxu0
    %570 = vdwg.mxu0
    %v571 = vld [vmem:[#allocation2] sm:$0xff]
    %v573 = vsel %vm244, %v568, 0
    %575 = vmatprep.subr.mxu0 0.0
    %576 = vmatpush1.msra.mxu0 %v480
    %577 = vmatprep.subr.mxu0 0.0
    %578 = vmatpush1.msra.mxu0 %v481
    %579 = vmatprep.subr.mxu0 0.0
    %580 = vmatpush1.msra.mxu0 %v482
    %581 = vmatprep.subr.mxu0 0.0
    %582 = vmatpush1.msra.mxu0 %v483
    %583 = vmatprep.subr.mxu0 0.0
    %584 = vmatpush1.msra.mxu0 %v484
    %585 = vmatprep.subr.mxu0 0.0
    %586 = vmatpush1.msra.mxu0 %v485
    %587 = vmatprep.subr.mxu0 0.0
    %588 = vmatpush1.msra.mxu0 %v486
    %589 = vmatprep.subr.mxu0 0.0
    %590 = vmatpush1.msra.mxu0 %v487
    %591 = vmatprep.subr.mxu0 0.0
    %592 = vmatpush1.msra.mxu0 0.0
    %593 = vmatprep.subr.mxu0 0.0
    %594 = vmatpush1.msra.mxu0 0.0
    %595 = vmatprep.subr.mxu0 0.0
    %596 = vmatpush1.msra.mxu0 0.0
    %597 = vmatprep.subr.mxu0 0.0
    %598 = vmatpush1.msra.mxu0 0.0
    %599 = vmatprep.subr.mxu0 0.0
    %600 = vmatpush1.msra.mxu0 0.0
    %601 = vmatprep.subr.mxu0 0.0
    %602 = vmatpush1.msra.mxu0 0.0
    %603 = vmatprep.subr.mxu0 0.0
    %604 = vmatpush1.msra.mxu0 0.0
    %605 = vmatprep.subr.mxu0 0.0
    %606 = vmatpush1.msra.mxu0 0.0
    %607 = vmatprep.subr.mxu0 0.0
    %608 = vmatpush1.msra.mxu0 0.0
    %609 = vmatprep.subr.mxu0 0.0
    %610 = vmatpush1.msra.mxu0 0.0
    %611 = vmatprep.subr.mxu0 0.0
    %612 = vmatpush1.msra.mxu0 0.0
    %613 = vmatprep.subr.mxu0 0.0
    %614 = vmatpush1.msra.mxu0 0.0
    %615 = vmatprep.subr.mxu0 0.0
    %616 = vmatpush1.msra.mxu0 0.0
    %617 = vmatprep.subr.mxu0 0.0
    %618 = vmatpush1.msra.mxu0 0.0
    %619 = vmatprep.subr.mxu0 0.0
    %620 = vmatpush1.msra.mxu0 0.0
    %621 = vmatprep.subr.mxu0 0.0
    %622 = vmatpush1.msra.mxu0 0.0
    %623 = vmatprep.subr.mxu0 0.0
    %624 = vmatpush1.msra.mxu0 0.0
    %625 = vmatprep.subr.mxu0 0.0
    %626 = vmatpush1.msra.mxu0 0.0
    %627 = vmatprep.subr.mxu0 0.0
    %628 = vmatpush1.msra.mxu0 0.0
    %629 = vmatprep.subr.mxu0 0.0
    %630 = vmatpush1.msra.mxu0 0.0
    %631 = vmatprep.subr.mxu0 0.0
    %632 = vmatpush1.msra.mxu0 0.0
    %633 = vmatprep.subr.mxu0 0.0
    %634 = vmatpush1.msra.mxu0 0.0
    %635 = vmatprep.subr.mxu0 0.0
    %636 = vmatpush1.msra.mxu0 0.0
    %637 = vmatprep.subr.mxu0 0.0
    %638 = vmatpush1.msra.mxu0 0.0
    %639 = vmatprep.mubr.f32.mxu0 0.0
    %640 = vmatmul.mubr.f32.gmra.mrb[0].mxu0 %v573
    %v641 = vpop.f32.mrb[0].mxu0
    %v642 = vadd.f32 0.0, %v641
    %v643 = vpop.f32.mrb[0].mxu0
    %644 = vdwg.mxu0
    %v645 = vadd.f32 %v571, %v642
    %v646 = vsub.f32 0.0, %v645
    %v647 = vmul.f32 %v646, 1.442695
    %v648 = vpow.pop %v647
    %v649 = vadd.f32 %v648, 1.0
    %v650 = vrcp.pop %v649
    %v651 = vmul.f32 1.0, %v650
    %v652 = vsub.f32 1.0, %v651
    %v653 = vmul.f32 %v652, %v568
    %v654 = vtanh.pop %v645
    %656 = vrot.lane.b32.xlu0 %v654, 96
    %v657 = vpop.permute.xlu0 %656
    %v659 = vmul.f32 %v651, %v657
    %v660 = vadd.f32 %v653, %v659
    %v661 = vld [vmem:[#allocation3] sm:$0xff]
    %v663 = vsel %vm262, %v660, 0
    %665 = vmatprep.subr.mxu0 0.0
    %666 = vmatpush1.msra.mxu0 %v488
    %667 = vmatprep.subr.mxu0 0.0
    %668 = vmatpush1.msra.mxu0 %v489
    %669 = vmatprep.subr.mxu0 0.0
    %670 = vmatpush1.msra.mxu0 %v490
    %671 = vmatprep.subr.mxu0 0.0
    %672 = vmatpush1.msra.mxu0 %v491
    %673 = vmatprep.subr.mxu0 0.0
    %674 = vmatpush1.msra.mxu0 0.0
    %675 = vmatprep.subr.mxu0 0.0
    %676 = vmatpush1.msra.mxu0 0.0
    %677 = vmatprep.subr.mxu0 0.0
    %678 = vmatpush1.msra.mxu0 0.0
    %679 = vmatprep.subr.mxu0 0.0
    %680 = vmatpush1.msra.mxu0 0.0
    %681 = vmatprep.subr.mxu0 0.0
    %682 = vmatpush1.msra.mxu0 0.0
    %683 = vmatprep.subr.mxu0 0.0
    %684 = vmatpush1.msra.mxu0 0.0
    %685 = vmatprep.subr.mxu0 0.0
    %686 = vmatpush1.msra.mxu0 0.0
    %687 = vmatprep.subr.mxu0 0.0
    %688 = vmatpush1.msra.mxu0 0.0
    %689 = vmatprep.subr.mxu0 0.0
    %690 = vmatpush1.msra.mxu0 0.0
    %691 = vmatprep.subr.mxu0 0.0
    %692 = vmatpush1.msra.mxu0 0.0
    %693 = vmatprep.subr.mxu0 0.0
    %694 = vmatpush1.msra.mxu0 0.0
    %695 = vmatprep.subr.mxu0 0.0
    %696 = vmatpush1.msra.mxu0 0.0
    %697 = vmatprep.subr.mxu0 0.0
    %698 = vmatpush1.msra.mxu0 0.0
    %699 = vmatprep.subr.mxu0 0.0
    %700 = vmatpush1.msra.mxu0 0.0
    %701 = vmatprep.subr.mxu0 0.0
    %702 = vmatpush1.msra.mxu0 0.0
    %703 = vmatprep.subr.mxu0 0.0
    %704 = vmatpush1.msra.mxu0 0.0
    %705 = vmatprep.subr.mxu0 0.0
    %706 = vmatpush1.msra.mxu0 0.0
    %707 = vmatprep.subr.mxu0 0.0
    %708 = vmatpush1.msra.mxu0 0.0
    %709 = vmatprep.subr.mxu0 0.0
    %710 = vmatpush1.msra.mxu0 0.0
    %711 = vmatprep.subr.mxu0 0.0
    %712 = vmatpush1.msra.mxu0 0.0
    %713 = vmatprep.subr.mxu0 0.0
    %714 = vmatpush1.msra.mxu0 0.0
    %715 = vmatprep.subr.mxu0 0.0
    %716 = vmatpush1.msra.mxu0 0.0
    %717 = vmatprep.subr.mxu0 0.0
    %718 = vmatpush1.msra.mxu0 0.0
    %719 = vmatprep.subr.mxu0 0.0
    %720 = vmatpush1.msra.mxu0 0.0
    %721 = vmatprep.subr.mxu0 0.0
    %722 = vmatpush1.msra.mxu0 0.0
    %723 = vmatprep.subr.mxu0 0.0
    %724 = vmatpush1.msra.mxu0 0.0
    %725 = vmatprep.subr.mxu0 0.0
    %726 = vmatpush1.msra.mxu0 0.0
    %727 = vmatprep.subr.mxu0 0.0
    %728 = vmatpush1.msra.mxu0 0.0
    %729 = vmatprep.mubr.f32.mxu0 0.0
    %730 = vmatmul.mubr.f32.gmra.mrb[0].mxu0 %v663
    %v731 = vpop.f32.mrb[0].mxu0
    %v732 = vadd.f32 0.0, %v731
    %v733 = vpop.f32.mrb[0].mxu0
    %734 = vdwg.mxu0
    %v735 = vadd.f32 %v661, %v732
    %v736 = vsub.f32 0.0, %v735
    %v737 = vmul.f32 %v736, 1.442695
    %v738 = vpow.pop %v737
    %v739 = vadd.f32 %v738, 1.0
    %v740 = vrcp.pop %v739
    %v741 = vmul.f32 1.0, %v740
    %v742 = vmul.f32 %v741, %v660
    %744 = vrot.lane.b32.xlu0 %v742, 32
    %v745 = vpop.permute.xlu0 %744
    %v747 = vsel %vm262, %v660, %v745
    %vm748 = vcmask 64512
    %v749 = vsel %vm748, %v495, 0.0
    %750 = vadd.xlane.f32.xlu0 %v749
    %v751 = vpop.xlane.xlu0 %750
    %v752 = vsel %vm748, %v496, 0.0
    %753 = vadd.xlane.f32.xlu0 %v752
    %v754 = vpop.xlane.xlu0 %753
    %v755 = vsub.f32 1.0, %v751
    %v756 = vsub.f32 1.0, %v754
    %v757 = vmul.f32 %v492, %v755
    %v758 = vmul.f32 %v493, %v756
    %v760 = vsel %vm748, %v495, 0
    %v763 = vsel %vm748, %v496, 0
    %765 = vmatprep.subr.mxu0 0.0
    %766 = vmatpush1.msra.mxu0 %v747
    %767 = vmatprep.subr.mxu0 0.0
    %768 = vmatpush1.msra.mxu0 0.0
    %769 = vmatprep.subr.mxu0 0.0
    %770 = vmatpush1.msra.mxu0 0.0
    %771 = vmatprep.subr.mxu0 0.0
    %772 = vmatpush1.msra.mxu0 0.0
    %773 = vmatprep.subr.mxu0 0.0
    %774 = vmatpush1.msra.mxu0 0.0
    %775 = vmatprep.subr.mxu0 0.0
    %776 = vmatpush1.msra.mxu0 0.0
    %777 = vmatprep.subr.mxu0 0.0
    %778 = vmatpush1.msra.mxu0 0.0
    %779 = vmatprep.subr.mxu0 0.0
    %780 = vmatpush1.msra.mxu0 0.0
    %781 = vmatprep.subr.mxu0 0.0
    %782 = vmatpush1.msra.mxu0 0.0
    %783 = vmatprep.subr.mxu0 0.0
    %784 = vmatpush1.msra.mxu0 0.0
    %785 = vmatprep.subr.mxu0 0.0
    %786 = vmatpush1.msra.mxu0 0.0
    %787 = vmatprep.subr.mxu0 0.0
    %788 = vmatpush1.msra.mxu0 0.0
    %789 = vmatprep.subr.mxu0 0.0
    %790 = vmatpush1.msra.mxu0 0.0
    %791 = vmatprep.subr.mxu0 0.0
    %792 = vmatpush1.msra.mxu0 0.0
    %793 = vmatprep.subr.mxu0 0.0
    %794 = vmatpush1.msra.mxu0 0.0
    %795 = vmatprep.subr.mxu0 0.0
    %796 = vmatpush1.msra.mxu0 0.0
    %797 = vmatprep.subr.mxu0 0.0
    %798 = vmatpush1.msra.mxu0 0.0
    %799 = vmatprep.subr.mxu0 0.0
    %800 = vmatpush1.msra.mxu0 0.0
    %801 = vmatprep.subr.mxu0 0.0
    %802 = vmatpush1.msra.mxu0 0.0
    %803 = vmatprep.subr.mxu0 0.0
    %804 = vmatpush1.msra.mxu0 0.0
    %805 = vmatprep.subr.mxu0 0.0
    %806 = vmatpush1.msra.mxu0 0.0
    %807 = vmatprep.subr.mxu0 0.0
    %808 = vmatpush1.msra.mxu0 0.0
    %809 = vmatprep.subr.mxu0 0.0
    %810 = vmatpush1.msra.mxu0 0.0
    %811 = vmatprep.subr.mxu0 0.0
    %812 = vmatpush1.msra.mxu0 0.0
    %813 = vmatprep.subr.mxu0 0.0
    %814 = vmatpush1.msra.mxu0 0.0
    %815 = vmatprep.subr.mxu0 0.0
    %816 = vmatpush1.msra.mxu0 0.0
    %817 = vmatprep.subr.mxu0 0.0
    %818 = vmatpush1.msra.mxu0 0.0
    %819 = vmatprep.subr.mxu0 0.0
    %820 = vmatpush1.msra.mxu0 0.0
    %821 = vmatprep.subr.mxu0 0.0
    %822 = vmatpush1.msra.mxu0 0.0
    %823 = vmatprep.subr.mxu0 0.0
    %824 = vmatpush1.msra.mxu0 0.0
    %825 = vmatprep.subr.mxu0 0.0
    %826 = vmatpush1.msra.mxu0 0.0
    %827 = vmatprep.subr.mxu0 0.0
    %828 = vmatpush1.msra.mxu0 0.0
    %829 = vmatprep.mubr.f32.mxu0 0.0
    %830 = vmatmul.mubr.f32.gmra.mrb[0].mxu0 %v760
    %v831 = vpop.f32.mrb[0].mxu0
    %v832 = vadd.f32 0.0, %v831
    %v833 = vpop.f32.mrb[0].mxu0
    %834 = vmatprep.mubr.f32.mxu0 0.0
    %835 = vmatmul.mubr.f32.gmra.mrb[0].mxu0 %v763
    %v836 = vpop.f32.mrb[0].mxu0
    %v837 = vadd.f32 0.0, %v836
    %v838 = vpop.f32.mrb[0].mxu0
    %839 = vdwg.mxu0
    %v840 = vadd.f32 %v757, %v832
    %v841 = vadd.f32 %v758, %v837
    %842 = vst.msk [vmem:[#allocation4] sm:$0xff] %vm244, %v840
    %843 = vst.msk [vmem:[#allocation4 + $0x8] sm:$0xff] %vm244, %v841
    %v844 = vld [vmem:[#allocation4] sm:$0xff]
    %v845 = vld [vmem:[#allocation4 + $0x8] sm:$0xff]
    %s846 = scalar_lea.vmem [#allocation10], 8
    %v847 = vld [vmem:[%s846] sm:$0xff]
    %s848 = scalar_lea.vmem [#allocation11], 16
    %v849 = vld [vmem:[%s848] sm:$0xff]
    %v850 = vld [vmem:[%s848 + $0x8] sm:$0xff]
    %v852 = vsel %vm497, %v847, 0
    %854 = vmatprep.subr.mxu0 0.0
    %855 = vmatpush1.msra.mxu0 %v844
    %856 = vmatprep.subr.mxu0 0.0
    %857 = vmatpush1.msra.mxu0 %v845
    %858 = vmatprep.subr.mxu0 0.0
    %859 = vmatpush1.msra.mxu0 0.0
    %860 = vmatprep.subr.mxu0 0.0
    %861 = vmatpush1.msra.mxu0 0.0
    %862 = vmatprep.subr.mxu0 0.0
    %863 = vmatpush1.msra.mxu0 0.0
    %864 = vmatprep.subr.mxu0 0.0
    %865 = vmatpush1.msra.mxu0 0.0
    %866 = vmatprep.subr.mxu0 0.0
    %867 = vmatpush1.msra.mxu0 0.0
    %868 = vmatprep.subr.mxu0 0.0
    %869 = vmatpush1.msra.mxu0 0.0
    %870 = vmatprep.subr.mxu0 0.0
    %871 = vmatpush1.msra.mxu0 0.0
    %872 = vmatprep.subr.mxu0 0.0
    %873 = vmatpush1.msra.mxu0 0.0
    %874 = vmatprep.subr.mxu0 0.0
    %875 = vmatpush1.msra.mxu0 0.0
    %876 = vmatprep.subr.mxu0 0.0
    %877 = vmatpush1.msra.mxu0 0.0
    %878 = vmatprep.subr.mxu0 0.0
    %879 = vmatpush1.msra.mxu0 0.0
    %880 = vmatprep.subr.mxu0 0.0
    %881 = vmatpush1.msra.mxu0 0.0
    %882 = vmatprep.subr.mxu0 0.0
    %883 = vmatpush1.msra.mxu0 0.0
    %884 = vmatprep.subr.mxu0 0.0
    %885 = vmatpush1.msra.mxu0 0.0
    %886 = vmatprep.subr.mxu0 0.0
    %887 = vmatpush1.msra.mxu0 0.0
    %888 = vmatprep.subr.mxu0 0.0
    %889 = vmatpush1.msra.mxu0 0.0
    %890 = vmatprep.subr.mxu0 0.0
    %891 = vmatpush1.msra.mxu0 0.0
    %892 = vmatprep.subr.mxu0 0.0
    %893 = vmatpush1.msra.mxu0 0.0
    %894 = vmatprep.subr.mxu0 0.0
    %895 = vmatpush1.msra.mxu0 0.0
    %896 = vmatprep.subr.mxu0 0.0
    %897 = vmatpush1.msra.mxu0 0.0
    %898 = vmatprep.subr.mxu0 0.0
    %899 = vmatpush1.msra.mxu0 0.0
    %900 = vmatprep.subr.mxu0 0.0
    %901 = vmatpush1.msra.mxu0 0.0
    %902 = vmatprep.subr.mxu0 0.0
    %903 = vmatpush1.msra.mxu0 0.0
    %904 = vmatprep.subr.mxu0 0.0
    %905 = vmatpush1.msra.mxu0 0.0
    %906 = vmatprep.subr.mxu0 0.0
    %907 = vmatpush1.msra.mxu0 0.0
    %908 = vmatprep.subr.mxu0 0.0
    %909 = vmatpush1.msra.mxu0 0.0
    %910 = vmatprep.subr.mxu0 0.0
    %911 = vmatpush1.msra.mxu0 0.0
    %912 = vmatprep.subr.mxu0 0.0
    %913 = vmatpush1.msra.mxu0 0.0
    %914 = vmatprep.subr.mxu0 0.0
    %915 = vmatpush1.msra.mxu0 0.0
    %916 = vmatprep.subr.mxu0 0.0
    %917 = vmatpush1.msra.mxu0 0.0
    %918 = vmatprep.mubr.f32.mxu0 0.0
    %919 = vmatmul.mubr.f32.gmra.mrb[0].mxu0 %v852
    %v920 = vpop.f32.mrb[0].mxu0
    %v921 = vadd.f32 0.0, %v920
    %v922 = vpop.f32.mrb[0].mxu0
    %923 = vdwg.mxu0
    %v924 = vld [vmem:[#allocation2 + $0x8] sm:$0xff]
    %v926 = vsel %vm244, %v921, 0
    %928 = vmatprep.subr.mxu0 0.0
    %929 = vmatpush1.msra.mxu0 %v480
    %930 = vmatprep.subr.mxu0 0.0
    %931 = vmatpush1.msra.mxu0 %v481
    %932 = vmatprep.subr.mxu0 0.0
    %933 = vmatpush1.msra.mxu0 %v482
    %934 = vmatprep.subr.mxu0 0.0
    %935 = vmatpush1.msra.mxu0 %v483
    %936 = vmatprep.subr.mxu0 0.0
    %937 = vmatpush1.msra.mxu0 %v484
    %938 = vmatprep.subr.mxu0 0.0
    %939 = vmatpush1.msra.mxu0 %v485
    %940 = vmatprep.subr.mxu0 0.0
    %941 = vmatpush1.msra.mxu0 %v486
    %942 = vmatprep.subr.mxu0 0.0
    %943 = vmatpush1.msra.mxu0 %v487
    %944 = vmatprep.subr.mxu0 0.0
    %945 = vmatpush1.msra.mxu0 0.0
    %946 = vmatprep.subr.mxu0 0.0
    %947 = vmatpush1.msra.mxu0 0.0
    %948 = vmatprep.subr.mxu0 0.0
    %949 = vmatpush1.msra.mxu0 0.0
    %950 = vmatprep.subr.mxu0 0.0
    %951 = vmatpush1.msra.mxu0 0.0
    %952 = vmatprep.subr.mxu0 0.0
    %953 = vmatpush1.msra.mxu0 0.0
    %954 = vmatprep.subr.mxu0 0.0
    %955 = vmatpush1.msra.mxu0 0.0
    %956 = vmatprep.subr.mxu0 0.0
    %957 = vmatpush1.msra.mxu0 0.0
    %958 = vmatprep.subr.mxu0 0.0
    %959 = vmatpush1.msra.mxu0 0.0
    %960 = vmatprep.subr.mxu0 0.0
    %961 = vmatpush1.msra.mxu0 0.0
    %962 = vmatprep.subr.mxu0 0.0
    %963 = vmatpush1.msra.mxu0 0.0
    %964 = vmatprep.subr.mxu0 0.0
    %965 = vmatpush1.msra.mxu0 0.0
    %966 = vmatprep.subr.mxu0 0.0
    %967 = vmatpush1.msra.mxu0 0.0
    %968 = vmatprep.subr.mxu0 0.0
    %969 = vmatpush1.msra.mxu0 0.0
    %970 = vmatprep.subr.mxu0 0.0
    %971 = vmatpush1.msra.mxu0 0.0
    %972 = vmatprep.subr.mxu0 0.0
    %973 = vmatpush1.msra.mxu0 0.0
    %974 = vmatprep.subr.mxu0 0.0
    %975 = vmatpush1.msra.mxu0 0.0
    %976 = vmatprep.subr.mxu0 0.0
    %977 = vmatpush1.msra.mxu0 0.0
    %978 = vmatprep.subr.mxu0 0.0
    %979 = vmatpush1.msra.mxu0 0.0
    %980 = vmatprep.subr.mxu0 0.0
    %981 = vmatpush1.msra.mxu0 0.0
    %982 = vmatprep.subr.mxu0 0.0
    %983 = vmatpush1.msra.mxu0 0.0
    %984 = vmatprep.subr.mxu0 0.0
    %985 = vmatpush1.msra.mxu0 0.0
    %986 = vmatprep.subr.mxu0 0.0
    %987 = vmatpush1.msra.mxu0 0.0
    %988 = vmatprep.subr.mxu0 0.0
    %989 = vmatpush1.msra.mxu0 0.0
    %990 = vmatprep.subr.mxu0 0.0
    %991 = vmatpush1.msra.mxu0 0.0
    %992 = vmatprep.mubr.f32.mxu0 0.0
    %993 = vmatmul.mubr.f32.gmra.mrb[0].mxu0 %v926
    %v994 = vpop.f32.mrb[0].mxu0
    %v995 = vadd.f32 0.0, %v994
    %v996 = vpop.f32.mrb[0].mxu0
    %997 = vdwg.mxu0
    %v998 = vadd.f32 %v924, %v995
    %v999 = vsub.f32 0.0, %v998
    %v1000 = vmul.f32 %v999, 1.442695
    %v1001 = vpow.pop %v1000
    %v1002 = vadd.f32 %v1001, 1.0
    %v1003 = vrcp.pop %v1002
    %v1004 = vmul.f32 1.0, %v1003
    %v1005 = vsub.f32 1.0, %v1004
    %v1006 = vmul.f32 %v1005, %v921
    %v1007 = vtanh.pop %v998
    %1009 = vrot.lane.b32.xlu0 %v1007, 96
    %v1010 = vpop.permute.xlu0 %1009
    %v1012 = vmul.f32 %v1004, %v1010
    %v1013 = vadd.f32 %v1006, %v1012
    %v1014 = vld [vmem:[#allocation3 + $0x8] sm:$0xff]
    %v1016 = vsel %vm262, %v1013, 0
    %1018 = vmatprep.subr.mxu0 0.0
    %1019 = vmatpush1.msra.mxu0 %v488
    %1020 = vmatprep.subr.mxu0 0.0
    %1021 = vmatpush1.msra.mxu0 %v489
    %1022 = vmatprep.subr.mxu0 0.0
    %1023 = vmatpush1.msra.mxu0 %v490
    %1024 = vmatprep.subr.mxu0 0.0
    %1025 = vmatpush1.msra.mxu0 %v491
    %1026 = vmatprep.subr.mxu0 0.0
    %1027 = vmatpush1.msra.mxu0 0.0
    %1028 = vmatprep.subr.mxu0 0.0
    %1029 = vmatpush1.msra.mxu0 0.0
    %1030 = vmatprep.subr.mxu0 0.0
    %1031 = vmatpush1.msra.mxu0 0.0
    %1032 = vmatprep.subr.mxu0 0.0
    %1033 = vmatpush1.msra.mxu0 0.0
    %1034 = vmatprep.subr.mxu0 0.0
    %1035 = vmatpush1.msra.mxu0 0.0
    %1036 = vmatprep.subr.mxu0 0.0
    %1037 = vmatpush1.msra.mxu0 0.0
    %1038 = vmatprep.subr.mxu0 0.0
    %1039 = vmatpush1.msra.mxu0 0.0
    %1040 = vmatprep.subr.mxu0 0.0
    %1041 = vmatpush1.msra.mxu0 0.0
    %1042 = vmatprep.subr.mxu0 0.0
    %1043 = vmatpush1.msra.mxu0 0.0
    %1044 = vmatprep.subr.mxu0 0.0
    %1045 = vmatpush1.msra.mxu0 0.0
    %1046 = vmatprep.subr.mxu0 0.0
    %1047 = vmatpush1.msra.mxu0 0.0
    %1048 = vmatprep.subr.mxu0 0.0
    %1049 = vmatpush1.msra.mxu0 0.0
    %1050 = vmatprep.subr.mxu0 0.0
    %1051 = vmatpush1.msra.mxu0 0.0
    %1052 = vmatprep.subr.mxu0 0.0
    %1053 = vmatpush1.msra.mxu0 0.0
    %1054 = vmatprep.subr.mxu0 0.0
    %1055 = vmatpush1.msra.mxu0 0.0
    %1056 = vmatprep.subr.mxu0 0.0
    %1057 = vmatpush1.msra.mxu0 0.0
    %1058 = vmatprep.subr.mxu0 0.0
    %1059 = vmatpush1.msra.mxu0 0.0
    %1060 = vmatprep.subr.mxu0 0.0
    %1061 = vmatpush1.msra.mxu0 0.0
    %1062 = vmatprep.subr.mxu0 0.0
    %1063 = vmatpush1.msra.mxu0 0.0
    %1064 = vmatprep.subr.mxu0 0.0
    %1065 = vmatpush1.msra.mxu0 0.0
    %1066 = vmatprep.subr.mxu0 0.0
    %1067 = vmatpush1.msra.mxu0 0.0
    %1068 = vmatprep.subr.mxu0 0.0
    %1069 = vmatpush1.msra.mxu0 0.0
    %1070 = vmatprep.subr.mxu0 0.0
    %1071 = vmatpush1.msra.mxu0 0.0
    %1072 = vmatprep.subr.mxu0 0.0
    %1073 = vmatpush1.msra.mxu0 0.0
    %1074 = vmatprep.subr.mxu0 0.0
    %1075 = vmatpush1.msra.mxu0 0.0
    %1076 = vmatprep.subr.mxu0 0.0
    %1077 = vmatpush1.msra.mxu0 0.0
    %1078 = vmatprep.subr.mxu0 0.0
    %1079 = vmatpush1.msra.mxu0 0.0
    %1080 = vmatprep.subr.mxu0 0.0
    %1081 = vmatpush1.msra.mxu0 0.0
    %1082 = vmatprep.mubr.f32.mxu0 0.0
    %1083 = vmatmul.mubr.f32.gmra.mrb[0].mxu0 %v1016
    %v1084 = vpop.f32.mrb[0].mxu0
    %v1085 = vadd.f32 0.0, %v1084
    %v1086 = vpop.f32.mrb[0].mxu0
    %1087 = vdwg.mxu0
    %v1088 = vadd.f32 %v1014, %v1085
    %v1089 = vsub.f32 0.0, %v1088
    %v1090 = vmul.f32 %v1089, 1.442695
    %v1091 = vpow.pop %v1090
    %v1092 = vadd.f32 %v1091, 1.0
    %v1093 = vrcp.pop %v1092
    %v1094 = vmul.f32 1.0, %v1093
    %v1095 = vmul.f32 %v1094, %v1013
    %1097 = vrot.lane.b32.xlu0 %v1095, 32
    %v1098 = vpop.permute.xlu0 %1097
    %v1100 = vsel %vm262, %v1013, %v1098
    %v1101 = vsel %vm748, %v849, 0.0
    %1102 = vadd.xlane.f32.xlu0 %v1101
    %v1103 = vpop.xlane.xlu0 %1102
    %v1104 = vsel %vm748, %v850, 0.0
    %1105 = vadd.xlane.f32.xlu0 %v1104
    %v1106 = vpop.xlane.xlu0 %1105
    %v1107 = vsub.f32 1.0, %v1103
    %v1108 = vsub.f32 1.0, %v1106
    %v1109 = vmul.f32 %v844, %v1107
    %v1110 = vmul.f32 %v845, %v1108
    %v1112 = vsel %vm748, %v849, 0
    %v1115 = vsel %vm748, %v850, 0
    %1117 = vmatprep.subr.mxu0 0.0
    %1118 = vmatpush1.msra.mxu0 %v1100
    %1119 = vmatprep.subr.mxu0 0.0
    %1120 = vmatpush1.msra.mxu0 0.0
    %1121 = vmatprep.subr.mxu0 0.0
    %1122 = vmatpush1.msra.mxu0 0.0
    %1123 = vmatprep.subr.mxu0 0.0
    %1124 = vmatpush1.msra.mxu0 0.0
    %1125 = vmatprep.subr.mxu0 0.0
    %1126 = vmatpush1.msra.mxu0 0.0
    %1127 = vmatprep.subr.mxu0 0.0
    %1128 = vmatpush1.msra.mxu0 0.0
    %1129 = vmatprep.subr.mxu0 0.0
    %1130 = vmatpush1.msra.mxu0 0.0
    %1131 = vmatprep.subr.mxu0 0.0
    %1132 = vmatpush1.msra.mxu0 0.0
    %1133 = vmatprep.subr.mxu0 0.0
    %1134 = vmatpush1.msra.mxu0 0.0
    %1135 = vmatprep.subr.mxu0 0.0
    %1136 = vmatpush1.msra.mxu0 0.0
    %1137 = vmatprep.subr.mxu0 0.0
    %1138 = vmatpush1.msra.mxu0 0.0
    %1139 = vmatprep.subr.mxu0 0.0
    %1140 = vmatpush1.msra.mxu0 0.0
    %1141 = vmatprep.subr.mxu0 0.0
    %1142 = vmatpush1.msra.mxu0 0.0
    %1143 = vmatprep.subr.mxu0 0.0
    %1144 = vmatpush1.msra.mxu0 0.0
    %1145 = vmatprep.subr.mxu0 0.0
    %1146 = vmatpush1.msra.mxu0 0.0
    %1147 = vmatprep.subr.mxu0 0.0
    %1148 = vmatpush1.msra.mxu0 0.0
    %1149 = vmatprep.subr.mxu0 0.0
    %1150 = vmatpush1.msra.mxu0 0.0
    %1151 = vmatprep.subr.mxu0 0.0
    %1152 = vmatpush1.msra.mxu0 0.0
    %1153 = vmatprep.subr.mxu0 0.0
    %1154 = vmatpush1.msra.mxu0 0.0
    %1155 = vmatprep.subr.mxu0 0.0
    %1156 = vmatpush1.msra.mxu0 0.0
    %1157 = vmatprep.subr.mxu0 0.0
    %1158 = vmatpush1.msra.mxu0 0.0
    %1159 = vmatprep.subr.mxu0 0.0
    %1160 = vmatpush1.msra.mxu0 0.0
    %1161 = vmatprep.subr.mxu0 0.0
    %1162 = vmatpush1.msra.mxu0 0.0
    %1163 = vmatprep.subr.mxu0 0.0
    %1164 = vmatpush1.msra.mxu0 0.0
    %1165 = vmatprep.subr.mxu0 0.0
    %1166 = vmatpush1.msra.mxu0 0.0
    %1167 = vmatprep.subr.mxu0 0.0
    %1168 = vmatpush1.msra.mxu0 0.0
    %1169 = vmatprep.subr.mxu0 0.0
    %1170 = vmatpush1.msra.mxu0 0.0
    %1171 = vmatprep.subr.mxu0 0.0
    %1172 = vmatpush1.msra.mxu0 0.0
    %1173 = vmatprep.subr.mxu0 0.0
    %1174 = vmatpush1.msra.mxu0 0.0
    %1175 = vmatprep.subr.mxu0 0.0
    %1176 = vmatpush1.msra.mxu0 0.0
    %1177 = vmatprep.subr.mxu0 0.0
    %1178 = vmatpush1.msra.mxu0 0.0
    %1179 = vmatprep.subr.mxu0 0.0
    %1180 = vmatpush1.msra.mxu0 0.0
    %1181 = vmatprep.mubr.f32.mxu0 0.0
    %1182 = vmatmul.mubr.f32.gmra.mrb[0].mxu0 %v1112
    %v1183 = vpop.f32.mrb[0].mxu0
    %v1184 = vadd.f32 0.0, %v1183
    %v1185 = vpop.f32.mrb[0].mxu0
    %1186 = vmatprep.mubr.f32.mxu0 0.0
    %1187 = vmatmul.mubr.f32.gmra.mrb[0].mxu0 %v1115
    %v1188 = vpop.f32.mrb[0].mxu0
    %v1189 = vadd.f32 0.0, %v1188
    %v1190 = vpop.f32.mrb[0].mxu0
    %1191 = vdwg.mxu0
    %v1192 = vadd.f32 %v1109, %v1184
    %v1193 = vadd.f32 %v1110, %v1189
    %1194 = vst.msk [vmem:[#allocation4] sm:$0xff] %vm244, %v1192
    %1195 = vst.msk [vmem:[#allocation4 + $0x8] sm:$0xff] %vm244, %v1193
    %v1196 = vld [vmem:[#allocation4] sm:$0xff]
    %v1197 = vld [vmem:[#allocation4 + $0x8] sm:$0xff]
    %s1198 = scalar_lea.vmem [#allocation10], 16
    %v1199 = vld [vmem:[%s1198] sm:$0xff]
    %s1200 = scalar_lea.vmem [#allocation11], 32
    %v1201 = vld [vmem:[%s1200] sm:$0xff]
    %v1202 = vld [vmem:[%s1200 + $0x8] sm:$0xff]
    %v1204 = vsel %vm497, %v1199, 0
    %1206 = vmatprep.subr.mxu0 0.0
    %1207 = vmatpush1.msra.mxu0 %v1196
    %1208 = vmatprep.subr.mxu0 0.0
    %1209 = vmatpush1.msra.mxu0 %v1197
    %1210 = vmatprep.subr.mxu0 0.0
    %1211 = vmatpush1.msra.mxu0 0.0
    %1212 = vmatprep.subr.mxu0 0.0
    %1213 = vmatpush1.msra.mxu0 0.0
    %1214 = vmatprep.subr.mxu0 0.0
    %1215 = vmatpush1.msra.mxu0 0.0
    %1216 = vmatprep.subr.mxu0 0.0
    %1217 = vmatpush1.msra.mxu0 0.0
    %1218 = vmatprep.subr.mxu0 0.0
    %1219 = vmatpush1.msra.mxu0 0.0
    %1220 = vmatprep.subr.mxu0 0.0
    %1221 = vmatpush1.msra.mxu0 0.0
    %1222 = vmatprep.subr.mxu0 0.0
    %1223 = vmatpush1.msra.mxu0 0.0
    %1224 = vmatprep.subr.mxu0 0.0
    %1225 = vmatpush1.msra.mxu0 0.0
    %1226 = vmatprep.subr.mxu0 0.0
    %1227 = vmatpush1.msra.mxu0 0.0
    %1228 = vmatprep.subr.mxu0 0.0
    %1229 = vmatpush1.msra.mxu0 0.0
    %1230 = vmatprep.subr.mxu0 0.0
    %1231 = vmatpush1.msra.mxu0 0.0
    %1232 = vmatprep.subr.mxu0 0.0
    %1233 = vmatpush1.msra.mxu0 0.0
    %1234 = vmatprep.subr.mxu0 0.0
    %1235 = vmatpush1.msra.mxu0 0.0
    %1236 = vmatprep.subr.mxu0 0.0
    %1237 = vmatpush1.msra.mxu0 0.0
    %1238 = vmatprep.subr.mxu0 0.0
    %1239 = vmatpush1.msra.mxu0 0.0
    %1240 = vmatprep.subr.mxu0 0.0
    %1241 = vmatpush1.msra.mxu0 0.0
    %1242 = vmatprep.subr.mxu0 0.0
    %1243 = vmatpush1.msra.mxu0 0.0
    %1244 = vmatprep.subr.mxu0 0.0
    %1245 = vmatpush1.msra.mxu0 0.0
    %1246 = vmatprep.subr.mxu0 0.0
    %1247 = vmatpush1.msra.mxu0 0.0
    %1248 = vmatprep.subr.mxu0 0.0
    %1249 = vmatpush1.msra.mxu0 0.0
    %1250 = vmatprep.subr.mxu0 0.0
    %1251 = vmatpush1.msra.mxu0 0.0
    %1252 = vmatprep.subr.mxu0 0.0
    %1253 = vmatpush1.msra.mxu0 0.0
    %1254 = vmatprep.subr.mxu0 0.0
    %1255 = vmatpush1.msra.mxu0 0.0
    %1256 = vmatprep.subr.mxu0 0.0
    %1257 = vmatpush1.msra.mxu0 0.0
    %1258 = vmatprep.subr.mxu0 0.0
    %1259 = vmatpush1.msra.mxu0 0.0
    %1260 = vmatprep.subr.mxu0 0.0
    %1261 = vmatpush1.msra.mxu0 0.0
    %1262 = vmatprep.subr.mxu0 0.0
    %1263 = vmatpush1.msra.mxu0 0.0
    %1264 = vmatprep.subr.mxu0 0.0
    %1265 = vmatpush1.msra.mxu0 0.0
    %1266 = vmatprep.subr.mxu0 0.0
    %1267 = vmatpush1.msra.mxu0 0.0
    %1268 = vmatprep.subr.mxu0 0.0
    %1269 = vmatpush1.msra.mxu0 0.0
    %1270 = vmatprep.mubr.f32.mxu0 0.0
    %1271 = vmatmul.mubr.f32.gmra.mrb[0].mxu0 %v1204
    %v1272 = vpop.f32.mrb[0].mxu0
    %v1273 = vadd.f32 0.0, %v1272
    %v1274 = vpop.f32.mrb[0].mxu0
    %1275 = vdwg.mxu0
    %v1276 = vld [vmem:[#allocation2 + $0x10] sm:$0xff]
    %v1278 = vsel %vm244, %v1273, 0
    %1280 = vmatprep.subr.mxu0 0.0
    %1281 = vmatpush1.msra.mxu0 %v480
    %1282 = vmatprep.subr.mxu0 0.0
    %1283 = vmatpush1.msra.mxu0 %v481
    %1284 = vmatprep.subr.mxu0 0.0
    %1285 = vmatpush1.msra.mxu0 %v482
    %1286 = vmatprep.subr.mxu0 0.0
    %1287 = vmatpush1.msra.mxu0 %v483
    %1288 = vmatprep.subr.mxu0 0.0
    %1289 = vmatpush1.msra.mxu0 %v484
    %1290 = vmatprep.subr.mxu0 0.0
    %1291 = vmatpush1.msra.mxu0 %v485
    %1292 = vmatprep.subr.mxu0 0.0
    %1293 = vmatpush1.msra.mxu0 %v486
    %1294 = vmatprep.subr.mxu0 0.0
    %1295 = vmatpush1.msra.mxu0 %v487
    %1296 = vmatprep.subr.mxu0 0.0
    %1297 = vmatpush1.msra.mxu0 0.0
    %1298 = vmatprep.subr.mxu0 0.0
    %1299 = vmatpush1.msra.mxu0 0.0
    %1300 = vmatprep.subr.mxu0 0.0
    %1301 = vmatpush1.msra.mxu0 0.0
    %1302 = vmatprep.subr.mxu0 0.0
    %1303 = vmatpush1.msra.mxu0 0.0
    %1304 = vmatprep.subr.mxu0 0.0
    %1305 = vmatpush1.msra.mxu0 0.0
    %1306 = vmatprep.subr.mxu0 0.0
    %1307 = vmatpush1.msra.mxu0 0.0
    %1308 = vmatprep.subr.mxu0 0.0
    %1309 = vmatpush1.msra.mxu0 0.0
    %1310 = vmatprep.subr.mxu0 0.0
    %1311 = vmatpush1.msra.mxu0 0.0
    %1312 = vmatprep.subr.mxu0 0.0
    %1313 = vmatpush1.msra.mxu0 0.0
    %1314 = vmatprep.subr.mxu0 0.0
    %1315 = vmatpush1.msra.mxu0 0.0
    %1316 = vmatprep.subr.mxu0 0.0
    %1317 = vmatpush1.msra.mxu0 0.0
    %1318 = vmatprep.subr.mxu0 0.0
    %1319 = vmatpush1.msra.mxu0 0.0
    %1320 = vmatprep.subr.mxu0 0.0
    %1321 = vmatpush1.msra.mxu0 0.0
    %1322 = vmatprep.subr.mxu0 0.0
    %1323 = vmatpush1.msra.mxu0 0.0
    %1324 = vmatprep.subr.mxu0 0.0
    %1325 = vmatpush1.msra.mxu0 0.0
    %1326 = vmatprep.subr.mxu0 0.0
    %1327 = vmatpush1.msra.mxu0 0.0
    %1328 = vmatprep.subr.mxu0 0.0
    %1329 = vmatpush1.msra.mxu0 0.0
    %1330 = vmatprep.subr.mxu0 0.0
    %1331 = vmatpush1.msra.mxu0 0.0
    %1332 = vmatprep.subr.mxu0 0.0
    %1333 = vmatpush1.msra.mxu0 0.0
    %1334 = vmatprep.subr.mxu0 0.0
    %1335 = vmatpush1.msra.mxu0 0.0
    %1336 = vmatprep.subr.mxu0 0.0
    %1337 = vmatpush1.msra.mxu0 0.0
    %1338 = vmatprep.subr.mxu0 0.0
    %1339 = vmatpush1.msra.mxu0 0.0
    %1340 = vmatprep.subr.mxu0 0.0
    %1341 = vmatpush1.msra.mxu0 0.0
    %1342 = vmatprep.subr.mxu0 0.0
    %1343 = vmatpush1.msra.mxu0 0.0
    %1344 = vmatprep.mubr.f32.mxu0 0.0
    %1345 = vmatmul.mubr.f32.gmra.mrb[0].mxu0 %v1278
    %v1346 = vpop.f32.mrb[0].mxu0
    %v1347 = vadd.f32 0.0, %v1346
    %v1348 = vpop.f32.mrb[0].mxu0
    %1349 = vdwg.mxu0
    %v1350 = vadd.f32 %v1276, %v1347
    %v1351 = vsub.f32 0.0, %v1350
    %v1352 = vmul.f32 %v1351, 1.442695
    %v1353 = vpow.pop %v1352
    %v1354 = vadd.f32 %v1353, 1.0
    %v1355 = vrcp.pop %v1354
    %v1356 = vmul.f32 1.0, %v1355
    %v1357 = vsub.f32 1.0, %v1356
    %v1358 = vmul.f32 %v1357, %v1273
    %v1359 = vtanh.pop %v1350
    %1361 = vrot.lane.b32.xlu0 %v1359, 96
    %v1362 = vpop.permute.xlu0 %1361
    %v1364 = vmul.f32 %v1356, %v1362
    %v1365 = vadd.f32 %v1358, %v1364
    %v1366 = vld [vmem:[#allocation3 + $0x10] sm:$0xff]
    %v1368 = vsel %vm262, %v1365, 0
    %1370 = vmatprep.subr.mxu0 0.0
    %1371 = vmatpush1.msra.mxu0 %v488
    %1372 = vmatprep.subr.mxu0 0.0
    %1373 = vmatpush1.msra.mxu0 %v489
    %1374 = vmatprep.subr.mxu0 0.0
    %1375 = vmatpush1.msra.mxu0 %v490
    %1376 = vmatprep.subr.mxu0 0.0
    %1377 = vmatpush1.msra.mxu0 %v491
    %1378 = vmatprep.subr.mxu0 0.0
    %1379 = vmatpush1.msra.mxu0 0.0
    %1380 = vmatprep.subr.mxu0 0.0
    %1381 = vmatpush1.msra.mxu0 0.0
    %1382 = vmatprep.subr.mxu0 0.0
    %1383 = vmatpush1.msra.mxu0 0.0
    %1384 = vmatprep.subr.mxu0 0.0
    %1385 = vmatpush1.msra.mxu0 0.0
    %1386 = vmatprep.subr.mxu0 0.0
    %1387 = vmatpush1.msra.mxu0 0.0
    %1388 = vmatprep.subr.mxu0 0.0
    %1389 = vmatpush1.msra.mxu0 0.0
    %1390 = vmatprep.subr.mxu0 0.0
    %1391 = vmatpush1.msra.mxu0 0.0
    %1392 = vmatprep.subr.mxu0 0.0
    %1393 = vmatpush1.msra.mxu0 0.0
    %1394 = vmatprep.subr.mxu0 0.0
    %1395 = vmatpush1.msra.mxu0 0.0
    %1396 = vmatprep.subr.mxu0 0.0
    %1397 = vmatpush1.msra.mxu0 0.0
    %1398 = vmatprep.subr.mxu0 0.0
    %1399 = vmatpush1.msra.mxu0 0.0
    %1400 = vmatprep.subr.mxu0 0.0
    %1401 = vmatpush1.msra.mxu0 0.0
    %1402 = vmatprep.subr.mxu0 0.0
    %1403 = vmatpush1.msra.mxu0 0.0
    %1404 = vmatprep.subr.mxu0 0.0
    %1405 = vmatpush1.msra.mxu0 0.0
    %1406 = vmatprep.subr.mxu0 0.0
    %1407 = vmatpush1.msra.mxu0 0.0
    %1408 = vmatprep.subr.mxu0 0.0
    %1409 = vmatpush1.msra.mxu0 0.0
    %1410 = vmatprep.subr.mxu0 0.0
    %1411 = vmatpush1.msra.mxu0 0.0
    %1412 = vmatprep.subr.mxu0 0.0
    %1413 = vmatpush1.msra.mxu0 0.0
    %1414 = vmatprep.subr.mxu0 0.0
    %1415 = vmatpush1.msra.mxu0 0.0
    %1416 = vmatprep.subr.mxu0 0.0
    %1417 = vmatpush1.msra.mxu0 0.0
    %1418 = vmatprep.subr.mxu0 0.0
    %1419 = vmatpush1.msra.mxu0 0.0
    %1420 = vmatprep.subr.mxu0 0.0
    %1421 = vmatpush1.msra.mxu0 0.0
    %1422 = vmatprep.subr.mxu0 0.0
    %1423 = vmatpush1.msra.mxu0 0.0
    %1424 = vmatprep.subr.mxu0 0.0
    %1425 = vmatpush1.msra.mxu0 0.0
    %1426 = vmatprep.subr.mxu0 0.0
    %1427 = vmatpush1.msra.mxu0 0.0
    %1428 = vmatprep.subr.mxu0 0.0
    %1429 = vmatpush1.msra.mxu0 0.0
    %1430 = vmatprep.subr.mxu0 0.0
    %1431 = vmatpush1.msra.mxu0 0.0
    %1432 = vmatprep.subr.mxu0 0.0
    %1433 = vmatpush1.msra.mxu0 0.0
    %1434 = vmatprep.mubr.f32.mxu0 0.0
    %1435 = vmatmul.mubr.f32.gmra.mrb[0].mxu0 %v1368
    %v1436 = vpop.f32.mrb[0].mxu0
    %v1437 = vadd.f32 0.0, %v1436
    %v1438 = vpop.f32.mrb[0].mxu0
    %1439 = vdwg.mxu0
    %v1440 = vadd.f32 %v1366, %v1437
    %v1441 = vsub.f32 0.0, %v1440
    %v1442 = vmul.f32 %v1441, 1.442695
    %v1443 = vpow.pop %v1442
    %v1444 = vadd.f32 %v1443, 1.0
    %v1445 = vrcp.pop %v1444
    %v1446 = vmul.f32 1.0, %v1445
    %v1447 = vmul.f32 %v1446, %v1365
    %1449 = vrot.lane.b32.xlu0 %v1447, 32
    %v1450 = vpop.permute.xlu0 %1449
    %v1452 = vsel %vm262, %v1365, %v1450
    %v1453 = vsel %vm748, %v1201, 0.0
    %1454 = vadd.xlane.f32.xlu0 %v1453
    %v1455 = vpop.xlane.xlu0 %1454
    %v1456 = vsel %vm748, %v1202, 0.0
    %1457 = vadd.xlane.f32.xlu0 %v1456
    %v1458 = vpop.xlane.xlu0 %1457
    %v1459 = vsub.f32 1.0, %v1455
    %v1460 = vsub.f32 1.0, %v1458
    %v1461 = vmul.f32 %v1196, %v1459
    %v1462 = vmul.f32 %v1197, %v1460
    %v1464 = vsel %vm748, %v1201, 0
    %v1467 = vsel %vm748, %v1202, 0
    %1469 = vmatprep.subr.mxu0 0.0
    %1470 = vmatpush1.msra.mxu0 %v1452
    %1471 = vmatprep.subr.mxu0 0.0
    %1472 = vmatpush1.msra.mxu0 0.0
    %1473 = vmatprep.subr.mxu0 0.0
    %1474 = vmatpush1.msra.mxu0 0.0
    %1475 = vmatprep.subr.mxu0 0.0
    %1476 = vmatpush1.msra.mxu0 0.0
    %1477 = vmatprep.subr.mxu0 0.0
    %1478 = vmatpush1.msra.mxu0 0.0
    %1479 = vmatprep.subr.mxu0 0.0
    %1480 = vmatpush1.msra.mxu0 0.0
    %1481 = vmatprep.subr.mxu0 0.0
    %1482 = vmatpush1.msra.mxu0 0.0
    %1483 = vmatprep.subr.mxu0 0.0
    %1484 = vmatpush1.msra.mxu0 0.0
    %1485 = vmatprep.subr.mxu0 0.0
    %1486 = vmatpush1.msra.mxu0 0.0
    %1487 = vmatprep.subr.mxu0 0.0
    %1488 = vmatpush1.msra.mxu0 0.0
    %1489 = vmatprep.subr.mxu0 0.0
    %1490 = vmatpush1.msra.mxu0 0.0
    %1491 = vmatprep.subr.mxu0 0.0
    %1492 = vmatpush1.msra.mxu0 0.0
    %1493 = vmatprep.subr.mxu0 0.0
    %1494 = vmatpush1.msra.mxu0 0.0
    %1495 = vmatprep.subr.mxu0 0.0
    %1496 = vmatpush1.msra.mxu0 0.0
    %1497 = vmatprep.subr.mxu0 0.0
    %1498 = vmatpush1.msra.mxu0 0.0
    %1499 = vmatprep.subr.mxu0 0.0
    %1500 = vmatpush1.msra.mxu0 0.0
    %1501 = vmatprep.subr.mxu0 0.0
    %1502 = vmatpush1.msra.mxu0 0.0
    %1503 = vmatprep.subr.mxu0 0.0
    %1504 = vmatpush1.msra.mxu0 0.0
    %1505 = vmatprep.subr.mxu0 0.0
    %1506 = vmatpush1.msra.mxu0 0.0
    %1507 = vmatprep.subr.mxu0 0.0
    %1508 = vmatpush1.msra.mxu0 0.0
    %1509 = vmatprep.subr.mxu0 0.0
    %1510 = vmatpush1.msra.mxu0 0.0
    %1511 = vmatprep.subr.mxu0 0.0
    %1512 = vmatpush1.msra.mxu0 0.0
    %1513 = vmatprep.subr.mxu0 0.0
    %1514 = vmatpush1.msra.mxu0 0.0
    %1515 = vmatprep.subr.mxu0 0.0
    %1516 = vmatpush1.msra.mxu0 0.0
    %1517 = vmatprep.subr.mxu0 0.0
    %1518 = vmatpush1.msra.mxu0 0.0
    %1519 = vmatprep.subr.mxu0 0.0
    %1520 = vmatpush1.msra.mxu0 0.0
    %1521 = vmatprep.subr.mxu0 0.0
    %1522 = vmatpush1.msra.mxu0 0.0
    %1523 = vmatprep.subr.mxu0 0.0
    %1524 = vmatpush1.msra.mxu0 0.0
    %1525 = vmatprep.subr.mxu0 0.0
    %1526 = vmatpush1.msra.mxu0 0.0
    %1527 = vmatprep.subr.mxu0 0.0
    %1528 = vmatpush1.msra.mxu0 0.0
    %1529 = vmatprep.subr.mxu0 0.0
    %1530 = vmatpush1.msra.mxu0 0.0
    %1531 = vmatprep.subr.mxu0 0.0
    %1532 = vmatpush1.msra.mxu0 0.0
    %1533 = vmatprep.mubr.f32.mxu0 0.0
    %1534 = vmatmul.mubr.f32.gmra.mrb[0].mxu0 %v1464
    %v1535 = vpop.f32.mrb[0].mxu0
    %v1536 = vadd.f32 0.0, %v1535
    %v1537 = vpop.f32.mrb[0].mxu0
    %1538 = vmatprep.mubr.f32.mxu0 0.0
    %1539 = vmatmul.mubr.f32.gmra.mrb[0].mxu0 %v1467
    %v1540 = vpop.f32.mrb[0].mxu0
    %v1541 = vadd.f32 0.0, %v1540
    %v1542 = vpop.f32.mrb[0].mxu0
    %1543 = vdwg.mxu0
    %v1544 = vadd.f32 %v1461, %v1536
    %v1545 = vadd.f32 %v1462, %v1541
    %1546 = vst.msk [vmem:[#allocation4] sm:$0xff] %vm244, %v1544
    %1547 = vst.msk [vmem:[#allocation4 + $0x8] sm:$0xff] %vm244, %v1545
    %v1548 = vld [vmem:[#allocation4] sm:$0xff]
    %v1549 = vld [vmem:[#allocation4 + $0x8] sm:$0xff]
    %s1550 = scalar_lea.vmem [#allocation10], 24
    %v1551 = vld [vmem:[%s1550] sm:$0xff]
    %s1552 = scalar_lea.vmem [#allocation11], 48
    %v1553 = vld [vmem:[%s1552] sm:$0xff]
    %v1554 = vld [vmem:[%s1552 + $0x8] sm:$0xff]
    %v1556 = vsel %vm497, %v1551, 0
    %1558 = vmatprep.subr.mxu0 0.0
    %1559 = vmatpush1.msra.mxu0 %v1548
    %1560 = vmatprep.subr.mxu0 0.0
    %1561 = vmatpush1.msra.mxu0 %v1549
    %1562 = vmatprep.subr.mxu0 0.0
    %1563 = vmatpush1.msra.mxu0 0.0
    %1564 = vmatprep.subr.mxu0 0.0
    %1565 = vmatpush1.msra.mxu0 0.0
    %1566 = vmatprep.subr.mxu0 0.0
    %1567 = vmatpush1.msra.mxu0 0.0
    %1568 = vmatprep.subr.mxu0 0.0
    %1569 = vmatpush1.msra.mxu0 0.0
    %1570 = vmatprep.subr.mxu0 0.0
    %1571 = vmatpush1.msra.mxu0 0.0
    %1572 = vmatprep.subr.mxu0 0.0
    %1573 = vmatpush1.msra.mxu0 0.0
    %1574 = vmatprep.subr.mxu0 0.0
    %1575 = vmatpush1.msra.mxu0 0.0
    %1576 = vmatprep.subr.mxu0 0.0
    %1577 = vmatpush1.msra.mxu0 0.0
    %1578 = vmatprep.subr.mxu0 0.0
    %1579 = vmatpush1.msra.mxu0 0.0
    %1580 = vmatprep.subr.mxu0 0.0
    %1581 = vmatpush1.msra.mxu0 0.0
    %1582 = vmatprep.subr.mxu0 0.0
    %1583 = vmatpush1.msra.mxu0 0.0
    %1584 = vmatprep.subr.mxu0 0.0
    %1585 = vmatpush1.msra.mxu0 0.0
    %1586 = vmatprep.subr.mxu0 0.0
    %1587 = vmatpush1.msra.mxu0 0.0
    %1588 = vmatprep.subr.mxu0 0.0
    %1589 = vmatpush1.msra.mxu0 0.0
    %1590 = vmatprep.subr.mxu0 0.0
    %1591 = vmatpush1.msra.mxu0 0.0
    %1592 = vmatprep.subr.mxu0 0.0
    %1593 = vmatpush1.msra.mxu0 0.0
    %1594 = vmatprep.subr.mxu0 0.0
    %1595 = vmatpush1.msra.mxu0 0.0
    %1596 = vmatprep.subr.mxu0 0.0
    %1597 = vmatpush1.msra.mxu0 0.0
    %1598 = vmatprep.subr.mxu0 0.0
    %1599 = vmatpush1.msra.mxu0 0.0
    %1600 = vmatprep.subr.mxu0 0.0
    %1601 = vmatpush1.msra.mxu0 0.0
    %1602 = vmatprep.subr.mxu0 0.0
    %1603 = vmatpush1.msra.mxu0 0.0
    %1604 = vmatprep.subr.mxu0 0.0
    %1605 = vmatpush1.msra.mxu0 0.0
    %1606 = vmatprep.subr.mxu0 0.0
    %1607 = vmatpush1.msra.mxu0 0.0
    %1608 = vmatprep.subr.mxu0 0.0
    %1609 = vmatpush1.msra.mxu0 0.0
    %1610 = vmatprep.subr.mxu0 0.0
    %1611 = vmatpush1.msra.mxu0 0.0
    %1612 = vmatprep.subr.mxu0 0.0
    %1613 = vmatpush1.msra.mxu0 0.0
    %1614 = vmatprep.subr.mxu0 0.0
    %1615 = vmatpush1.msra.mxu0 0.0
    %1616 = vmatprep.subr.mxu0 0.0
    %1617 = vmatpush1.msra.mxu0 0.0
    %1618 = vmatprep.subr.mxu0 0.0
    %1619 = vmatpush1.msra.mxu0 0.0
    %1620 = vmatprep.subr.mxu0 0.0
    %1621 = vmatpush1.msra.mxu0 0.0
    %1622 = vmatprep.mubr.f32.mxu0 0.0
    %1623 = vmatmul.mubr.f32.gmra.mrb[0].mxu0 %v1556
    %v1624 = vpop.f32.mrb[0].mxu0
    %v1625 = vadd.f32 0.0, %v1624
    %v1626 = vpop.f32.mrb[0].mxu0
    %1627 = vdwg.mxu0
    %v1628 = vld [vmem:[#allocation2 + $0x18] sm:$0xff]
    %v1630 = vsel %vm244, %v1625, 0
    %1632 = vmatprep.subr.mxu0 0.0
    %1633 = vmatpush1.msra.mxu0 %v480
    %1634 = vmatprep.subr.mxu0 0.0
    %1635 = vmatpush1.msra.mxu0 %v481
    %1636 = vmatprep.subr.mxu0 0.0
    %1637 = vmatpush1.msra.mxu0 %v482
    %1638 = vmatprep.subr.mxu0 0.0
    %1639 = vmatpush1.msra.mxu0 %v483
    %1640 = vmatprep.subr.mxu0 0.0
    %1641 = vmatpush1.msra.mxu0 %v484
    %1642 = vmatprep.subr.mxu0 0.0
    %1643 = vmatpush1.msra.mxu0 %v485
    %1644 = vmatprep.subr.mxu0 0.0
    %1645 = vmatpush1.msra.mxu0 %v486
    %1646 = vmatprep.subr.mxu0 0.0
    %1647 = vmatpush1.msra.mxu0 %v487
    %1648 = vmatprep.subr.mxu0 0.0
    %1649 = vmatpush1.msra.mxu0 0.0
    %1650 = vmatprep.subr.mxu0 0.0
    %1651 = vmatpush1.msra.mxu0 0.0
    %1652 = vmatprep.subr.mxu0 0.0
    %1653 = vmatpush1.msra.mxu0 0.0
    %1654 = vmatprep.subr.mxu0 0.0
    %1655 = vmatpush1.msra.mxu0 0.0
    %1656 = vmatprep.subr.mxu0 0.0
    %1657 = vmatpush1.msra.mxu0 0.0
    %1658 = vmatprep.subr.mxu0 0.0
    %1659 = vmatpush1.msra.mxu0 0.0
    %1660 = vmatprep.subr.mxu0 0.0
    %1661 = vmatpush1.msra.mxu0 0.0
    %1662 = vmatprep.subr.mxu0 0.0
    %1663 = vmatpush1.msra.mxu0 0.0
    %1664 = vmatprep.subr.mxu0 0.0
    %1665 = vmatpush1.msra.mxu0 0.0
    %1666 = vmatprep.subr.mxu0 0.0
    %1667 = vmatpush1.msra.mxu0 0.0
    %1668 = vmatprep.subr.mxu0 0.0
    %1669 = vmatpush1.msra.mxu0 0.0
    %1670 = vmatprep.subr.mxu0 0.0
    %1671 = vmatpush1.msra.mxu0 0.0
    %1672 = vmatprep.subr.mxu0 0.0
    %1673 = vmatpush1.msra.mxu0 0.0
    %1674 = vmatprep.subr.mxu0 0.0
    %1675 = vmatpush1.msra.mxu0 0.0
    %1676 = vmatprep.subr.mxu0 0.0
    %1677 = vmatpush1.msra.mxu0 0.0
    %1678 = vmatprep.subr.mxu0 0.0
    %1679 = vmatpush1.msra.mxu0 0.0
    %1680 = vmatprep.subr.mxu0 0.0
    %1681 = vmatpush1.msra.mxu0 0.0
    %1682 = vmatprep.subr.mxu0 0.0
    %1683 = vmatpush1.msra.mxu0 0.0
    %1684 = vmatprep.subr.mxu0 0.0
    %1685 = vmatpush1.msra.mxu0 0.0
    %1686 = vmatprep.subr.mxu0 0.0
    %1687 = vmatpush1.msra.mxu0 0.0
    %1688 = vmatprep.subr.mxu0 0.0
    %1689 = vmatpush1.msra.mxu0 0.0
    %1690 = vmatprep.subr.mxu0 0.0
    %1691 = vmatpush1.msra.mxu0 0.0
    %1692 = vmatprep.subr.mxu0 0.0
    %1693 = vmatpush1.msra.mxu0 0.0
    %1694 = vmatprep.subr.mxu0 0.0
    %1695 = vmatpush1.msra.mxu0 0.0
    %1696 = vmatprep.mubr.f32.mxu0 0.0
    %1697 = vmatmul.mubr.f32.gmra.mrb[0].mxu0 %v1630
    %v1698 = vpop.f32.mrb[0].mxu0
    %v1699 = vadd.f32 0.0, %v1698
    %v1700 = vpop.f32.mrb[0].mxu0
    %1701 = vdwg.mxu0
    %v1702 = vadd.f32 %v1628, %v1699
    %v1703 = vsub.f32 0.0, %v1702
    %v1704 = vmul.f32 %v1703, 1.442695
    %v1705 = vpow.pop %v1704
    %v1706 = vadd.f32 %v1705, 1.0
    %v1707 = vrcp.pop %v1706
    %v1708 = vmul.f32 1.0, %v1707
    %v1709 = vsub.f32 1.0, %v1708
    %v1710 = vmul.f32 %v1709, %v1625
    %v1711 = vtanh.pop %v1702
    %1713 = vrot.lane.b32.xlu0 %v1711, 96
    %v1714 = vpop.permute.xlu0 %1713
    %v1716 = vmul.f32 %v1708, %v1714
    %v1717 = vadd.f32 %v1710, %v1716
    %v1718 = vld [vmem:[#allocation3 + $0x18] sm:$0xff]
    %v1720 = vsel %vm262, %v1717, 0
    %1722 = vmatprep.subr.mxu0 0.0
    %1723 = vmatpush1.msra.mxu0 %v488
    %1724 = vmatprep.subr.mxu0 0.0
    %1725 = vmatpush1.msra.mxu0 %v489
    %1726 = vmatprep.subr.mxu0 0.0
    %1727 = vmatpush1.msra.mxu0 %v490
    %1728 = vmatprep.subr.mxu0 0.0
    %1729 = vmatpush1.msra.mxu0 %v491
    %1730 = vmatprep.subr.mxu0 0.0
    %1731 = vmatpush1.msra.mxu0 0.0
    %1732 = vmatprep.subr.mxu0 0.0
    %1733 = vmatpush1.msra.mxu0 0.0
    %1734 = vmatprep.subr.mxu0 0.0
    %1735 = vmatpush1.msra.mxu0 0.0
    %1736 = vmatprep.subr.mxu0 0.0
    %1737 = vmatpush1.msra.mxu0 0.0
    %1738 = vmatprep.subr.mxu0 0.0
    %1739 = vmatpush1.msra.mxu0 0.0
    %1740 = vmatprep.subr.mxu0 0.0
    %1741 = vmatpush1.msra.mxu0 0.0
    %1742 = vmatprep.subr.mxu0 0.0
    %1743 = vmatpush1.msra.mxu0 0.0
    %1744 = vmatprep.subr.mxu0 0.0
    %1745 = vmatpush1.msra.mxu0 0.0
    %1746 = vmatprep.subr.mxu0 0.0
    %1747 = vmatpush1.msra.mxu0 0.0
    %1748 = vmatprep.subr.mxu0 0.0
    %1749 = vmatpush1.msra.mxu0 0.0
    %1750 = vmatprep.subr.mxu0 0.0
    %1751 = vmatpush1.msra.mxu0 0.0
    %1752 = vmatprep.subr.mxu0 0.0
    %1753 = vmatpush1.msra.mxu0 0.0
    %1754 = vmatprep.subr.mxu0 0.0
    %1755 = vmatpush1.msra.mxu0 0.0
    %1756 = vmatprep.subr.mxu0 0.0
    %1757 = vmatpush1.msra.mxu0 0.0
    %1758 = vmatprep.subr.mxu0 0.0
    %1759 = vmatpush1.msra.mxu0 0.0
    %1760 = vmatprep.subr.mxu0 0.0
    %1761 = vmatpush1.msra.mxu0 0.0
    %1762 = vmatprep.subr.mxu0 0.0
    %1763 = vmatpush1.msra.mxu0 0.0
    %1764 = vmatprep.subr.mxu0 0.0
    %1765 = vmatpush1.msra.mxu0 0.0
    %1766 = vmatprep.subr.mxu0 0.0
    %1767 = vmatpush1.msra.mxu0 0.0
    %1768 = vmatprep.subr.mxu0 0.0
    %1769 = vmatpush1.msra.mxu0 0.0
    %1770 = vmatprep.subr.mxu0 0.0
    %1771 = vmatpush1.msra.mxu0 0.0
    %1772 = vmatprep.subr.mxu0 0.0
    %1773 = vmatpush1.msra.mxu0 0.0
    %1774 = vmatprep.subr.mxu0 0.0
    %1775 = vmatpush1.msra.mxu0 0.0
    %1776 = vmatprep.subr.mxu0 0.0
    %1777 = vmatpush1.msra.mxu0 0.0
    %1778 = vmatprep.subr.mxu0 0.0
    %1779 = vmatpush1.msra.mxu0 0.0
    %1780 = vmatprep.subr.mxu0 0.0
    %1781 = vmatpush1.msra.mxu0 0.0
    %1782 = vmatprep.subr.mxu0 0.0
    %1783 = vmatpush1.msra.mxu0 0.0
    %1784 = vmatprep.subr.mxu0 0.0
    %1785 = vmatpush1.msra.mxu0 0.0
    %1786 = vmatprep.mubr.f32.mxu0 0.0
    %1787 = vmatmul.mubr.f32.gmra.mrb[0].mxu0 %v1720
    %v1788 = vpop.f32.mrb[0].mxu0
    %v1789 = vadd.f32 0.0, %v1788
    %v1790 = vpop.f32.mrb[0].mxu0
    %1791 = vdwg.mxu0
    %v1792 = vadd.f32 %v1718, %v1789
    %v1793 = vsub.f32 0.0, %v1792
    %v1794 = vmul.f32 %v1793, 1.442695
    %v1795 = vpow.pop %v1794
    %v1796 = vadd.f32 %v1795, 1.0
    %v1797 = vrcp.pop %v1796
    %v1798 = vmul.f32 1.0, %v1797
    %v1799 = vmul.f32 %v1798, %v1717
    %1801 = vrot.lane.b32.xlu0 %v1799, 32
    %v1802 = vpop.permute.xlu0 %1801
    %v1804 = vsel %vm262, %v1717, %v1802
    %v1805 = vsel %vm748, %v1553, 0.0
    %1806 = vadd.xlane.f32.xlu0 %v1805
    %v1807 = vpop.xlane.xlu0 %1806
    %v1808 = vsel %vm748, %v1554, 0.0
    %1809 = vadd.xlane.f32.xlu0 %v1808
    %v1810 = vpop.xlane.xlu0 %1809
    %v1811 = vsub.f32 1.0, %v1807
    %v1812 = vsub.f32 1.0, %v1810
    %v1813 = vmul.f32 %v1548, %v1811
    %v1814 = vmul.f32 %v1549, %v1812
    %v1816 = vsel %vm748, %v1553, 0
    %v1819 = vsel %vm748, %v1554, 0
    %1821 = vmatprep.subr.mxu0 0.0
    %1822 = vmatpush1.msra.mxu0 %v1804
    %1823 = vmatprep.subr.mxu0 0.0
    %1824 = vmatpush1.msra.mxu0 0.0
    %1825 = vmatprep.subr.mxu0 0.0
    %1826 = vmatpush1.msra.mxu0 0.0
    %1827 = vmatprep.subr.mxu0 0.0
    %1828 = vmatpush1.msra.mxu0 0.0
    %1829 = vmatprep.subr.mxu0 0.0
    %1830 = vmatpush1.msra.mxu0 0.0
    %1831 = vmatprep.subr.mxu0 0.0
    %1832 = vmatpush1.msra.mxu0 0.0
    %1833 = vmatprep.subr.mxu0 0.0
    %1834 = vmatpush1.msra.mxu0 0.0
    %1835 = vmatprep.subr.mxu0 0.0
    %1836 = vmatpush1.msra.mxu0 0.0
    %1837 = vmatprep.subr.mxu0 0.0
    %1838 = vmatpush1.msra.mxu0 0.0
    %1839 = vmatprep.subr.mxu0 0.0
    %1840 = vmatpush1.msra.mxu0 0.0
    %1841 = vmatprep.subr.mxu0 0.0
    %1842 = vmatpush1.msra.mxu0 0.0
    %1843 = vmatprep.subr.mxu0 0.0
    %1844 = vmatpush1.msra.mxu0 0.0
    %1845 = vmatprep.subr.mxu0 0.0
    %1846 = vmatpush1.msra.mxu0 0.0
    %1847 = vmatprep.subr.mxu0 0.0
    %1848 = vmatpush1.msra.mxu0 0.0
    %1849 = vmatprep.subr.mxu0 0.0
    %1850 = vmatpush1.msra.mxu0 0.0
    %1851 = vmatprep.subr.mxu0 0.0
    %1852 = vmatpush1.msra.mxu0 0.0
    %1853 = vmatprep.subr.mxu0 0.0
    %1854 = vmatpush1.msra.mxu0 0.0
    %1855 = vmatprep.subr.mxu0 0.0
    %1856 = vmatpush1.msra.mxu0 0.0
    %1857 = vmatprep.subr.mxu0 0.0
    %1858 = vmatpush1.msra.mxu0 0.0
    %1859 = vmatprep.subr.mxu0 0.0
    %1860 = vmatpush1.msra.mxu0 0.0
    %1861 = vmatprep.subr.mxu0 0.0
    %1862 = vmatpush1.msra.mxu0 0.0
    %1863 = vmatprep.subr.mxu0 0.0
    %1864 = vmatpush1.msra.mxu0 0.0
    %1865 = vmatprep.subr.mxu0 0.0
    %1866 = vmatpush1.msra.mxu0 0.0
    %1867 = vmatprep.subr.mxu0 0.0
    %1868 = vmatpush1.msra.mxu0 0.0
    %1869 = vmatprep.subr.mxu0 0.0
    %1870 = vmatpush1.msra.mxu0 0.0
    %1871 = vmatprep.subr.mxu0 0.0
    %1872 = vmatpush1.msra.mxu0 0.0
    %1873 = vmatprep.subr.mxu0 0.0
    %1874 = vmatpush1.msra.mxu0 0.0
    %1875 = vmatprep.subr.mxu0 0.0
    %1876 = vmatpush1.msra.mxu0 0.0
    %1877 = vmatprep.subr.mxu0 0.0
    %1878 = vmatpush1.msra.mxu0 0.0
    %1879 = vmatprep.subr.mxu0 0.0
    %1880 = vmatpush1.msra.mxu0 0.0
    %1881 = vmatprep.subr.mxu0 0.0
    %1882 = vmatpush1.msra.mxu0 0.0
    %1883 = vmatprep.subr.mxu0 0.0
    %1884 = vmatpush1.msra.mxu0 0.0
    %1885 = vmatprep.mubr.f32.mxu0 0.0
    %1886 = vmatmul.mubr.f32.gmra.mrb[0].mxu0 %v1816
    %v1887 = vpop.f32.mrb[0].mxu0
    %v1888 = vadd.f32 0.0, %v1887
    %v1889 = vpop.f32.mrb[0].mxu0
    %1890 = vmatprep.mubr.f32.mxu0 0.0
    %1891 = vmatmul.mubr.f32.gmra.mrb[0].mxu0 %v1819
    %v1892 = vpop.f32.mrb[0].mxu0
    %v1893 = vadd.f32 0.0, %v1892
    %v1894 = vpop.f32.mrb[0].mxu0
    %1895 = vdwg.mxu0
    %v1896 = vadd.f32 %v1813, %v1888
    %v1897 = vadd.f32 %v1814, %v1893
    %1898 = vst.msk [vmem:[#allocation4] sm:$0xff] %vm244, %v1896
    %1899 = vst.msk [vmem:[#allocation4 + $0x8] sm:$0xff] %vm244, %v1897
    %v1900 = vld [vmem:[#allocation4] sm:$0xff]
    %v1901 = vld [vmem:[#allocation4 + $0x8] sm:$0xff]
    %v1902 = vld [vmem:[#allocation22] sm:$0xff]
    %v1904 = vsel %vm497, %v1902, 0
    %1906 = vmatprep.subr.mxu0 0.0
    %1907 = vmatpush1.msra.mxu0 %v1900
    %1908 = vmatprep.subr.mxu0 0.0
    %1909 = vmatpush1.msra.mxu0 %v1901
    %1910 = vmatprep.subr.mxu0 0.0
    %1911 = vmatpush1.msra.mxu0 0.0
    %1912 = vmatprep.subr.mxu0 0.0
    %1913 = vmatpush1.msra.mxu0 0.0
    %1914 = vmatprep.subr.mxu0 0.0
    %1915 = vmatpush1.msra.mxu0 0.0
    %1916 = vmatprep.subr.mxu0 0.0
    %1917 = vmatpush1.msra.mxu0 0.0
    %1918 = vmatprep.subr.mxu0 0.0
    %1919 = vmatpush1.msra.mxu0 0.0
    %1920 = vmatprep.subr.mxu0 0.0
    %1921 = vmatpush1.msra.mxu0 0.0
    %1922 = vmatprep.subr.mxu0 0.0
    %1923 = vmatpush1.msra.mxu0 0.0
    %1924 = vmatprep.subr.mxu0 0.0
    %1925 = vmatpush1.msra.mxu0 0.0
    %1926 = vmatprep.subr.mxu0 0.0
    %1927 = vmatpush1.msra.mxu0 0.0
    %1928 = vmatprep.subr.mxu0 0.0
    %1929 = vmatpush1.msra.mxu0 0.0
    %1930 = vmatprep.subr.mxu0 0.0
    %1931 = vmatpush1.msra.mxu0 0.0
    %1932 = vmatprep.subr.mxu0 0.0
    %1933 = vmatpush1.msra.mxu0 0.0
    %1934 = vmatprep.subr.mxu0 0.0
    %1935 = vmatpush1.msra.mxu0 0.0
    %1936 = vmatprep.subr.mxu0 0.0
    %1937 = vmatpush1.msra.mxu0 0.0
    %1938 = vmatprep.subr.mxu0 0.0
    %1939 = vmatpush1.msra.mxu0 0.0
    %1940 = vmatprep.subr.mxu0 0.0
    %1941 = vmatpush1.msra.mxu0 0.0
    %1942 = vmatprep.subr.mxu0 0.0
    %1943 = vmatpush1.msra.mxu0 0.0
    %1944 = vmatprep.subr.mxu0 0.0
    %1945 = vmatpush1.msra.mxu0 0.0
    %1946 = vmatprep.subr.mxu0 0.0
    %1947 = vmatpush1.msra.mxu0 0.0
    %1948 = vmatprep.subr.mxu0 0.0
    %1949 = vmatpush1.msra.mxu0 0.0
    %1950 = vmatprep.subr.mxu0 0.0
    %1951 = vmatpush1.msra.mxu0 0.0
    %1952 = vmatprep.subr.mxu0 0.0
    %1953 = vmatpush1.msra.mxu0 0.0
    %1954 = vmatprep.subr.mxu0 0.0
    %1955 = vmatpush1.msra.mxu0 0.0
    %1956 = vmatprep.subr.mxu0 0.0
    %1957 = vmatpush1.msra.mxu0 0.0
    %1958 = vmatprep.subr.mxu0 0.0
    %1959 = vmatpush1.msra.mxu0 0.0
    %1960 = vmatprep.subr.mxu0 0.0
    %1961 = vmatpush1.msra.mxu0 0.0
    %1962 = vmatprep.subr.mxu0 0.0
    %1963 = vmatpush1.msra.mxu0 0.0
    %1964 = vmatprep.subr.mxu0 0.0
    %1965 = vmatpush1.msra.mxu0 0.0
    %1966 = vmatprep.subr.mxu0 0.0
    %1967 = vmatpush1.msra.mxu0 0.0
    %1968 = vmatprep.subr.mxu0 0.0
    %1969 = vmatpush1.msra.mxu0 0.0
    %1970 = vmatprep.mubr.f32.mxu0 0.0
    %1971 = vmatmul.mubr.f32.gmra.mrb[0].mxu0 %v1904
    %v1972 = vpop.f32.mrb[0].mxu0
    %v1973 = vadd.f32 0.0, %v1972
    %v1974 = vpop.f32.mrb[0].mxu0
    %1975 = vdwg.mxu0
    %v1976 = vld [vmem:[#allocation23] sm:$0xff]
    %v1977 = vld [vmem:[#allocation25] sm:$0xff]
    %v1978 = vld [vmem:[#allocation25 + $0x8] sm:$0xff]
    %v1979 = vld [vmem:[#allocation25 + $0x10] sm:$0xff]
    %v1980 = vld [vmem:[#allocation25 + $0x18] sm:$0xff]
    %v1981 = vld [vmem:[#allocation26] sm:$0xff]
    %v1982 = vld [vmem:[#allocation26 + $0x8] sm:$0xff]
    %v1983 = vld [vmem:[#allocation26 + $0x10] sm:$0xff]
    %v1984 = vld [vmem:[#allocation26 + $0x18] sm:$0xff]
    %v1986 = vsel %vm262, %v1973, 0
    %1988 = vmatprep.subr.mxu0 0.0
    %1989 = vmatpush1.msra.mxu0 %v1981
    %1990 = vmatprep.subr.mxu0 0.0
    %1991 = vmatpush1.msra.mxu0 %v1982
    %1992 = vmatprep.subr.mxu0 0.0
    %1993 = vmatpush1.msra.mxu0 %v1983
    %1994 = vmatprep.subr.mxu0 0.0
    %1995 = vmatpush1.msra.mxu0 %v1984
    %1996 = vmatprep.subr.mxu0 0.0
    %1997 = vmatpush1.msra.mxu0 0.0
    %1998 = vmatprep.subr.mxu0 0.0
    %1999 = vmatpush1.msra.mxu0 0.0
    %2000 = vmatprep.subr.mxu0 0.0
    %2001 = vmatpush1.msra.mxu0 0.0
    %2002 = vmatprep.subr.mxu0 0.0
    %2003 = vmatpush1.msra.mxu0 0.0
    %2004 = vmatprep.subr.mxu0 0.0
    %2005 = vmatpush1.msra.mxu0 0.0
    %2006 = vmatprep.subr.mxu0 0.0
    %2007 = vmatpush1.msra.mxu0 0.0
    %2008 = vmatprep.subr.mxu0 0.0
    %2009 = vmatpush1.msra.mxu0 0.0
    %2010 = vmatprep.subr.mxu0 0.0
    %2011 = vmatpush1.msra.mxu0 0.0
    %2012 = vmatprep.subr.mxu0 0.0
    %2013 = vmatpush1.msra.mxu0 0.0
    %2014 = vmatprep.subr.mxu0 0.0
    %2015 = vmatpush1.msra.mxu0 0.0
    %2016 = vmatprep.subr.mxu0 0.0
    %2017 = vmatpush1.msra.mxu0 0.0
    %2018 = vmatprep.subr.mxu0 0.0
    %2019 = vmatpush1.msra.mxu0 0.0
    %2020 = vmatprep.subr.mxu0 0.0
    %2021 = vmatpush1.msra.mxu0 0.0
    %2022 = vmatprep.subr.mxu0 0.0
    %2023 = vmatpush1.msra.mxu0 0.0
    %2024 = vmatprep.subr.mxu0 0.0
    %2025 = vmatpush1.msra.mxu0 0.0
    %2026 = vmatprep.subr.mxu0 0.0
    %2027 = vmatpush1.msra.mxu0 0.0
    %2028 = vmatprep.subr.mxu0 0.0
    %2029 = vmatpush1.msra.mxu0 0.0
    %2030 = vmatprep.subr.mxu0 0.0
    %2031 = vmatpush1.msra.mxu0 0.0
    %2032 = vmatprep.subr.mxu0 0.0
    %2033 = vmatpush1.msra.mxu0 0.0
    %2034 = vmatprep.subr.mxu0 0.0
    %2035 = vmatpush1.msra.mxu0 0.0
    %2036 = vmatprep.subr.mxu0 0.0
    %2037 = vmatpush1.msra.mxu0 0.0
    %2038 = vmatprep.subr.mxu0 0.0
    %2039 = vmatpush1.msra.mxu0 0.0
    %2040 = vmatprep.subr.mxu0 0.0
    %2041 = vmatpush1.msra.mxu0 0.0
    %2042 = vmatprep.subr.mxu0 0.0
    %2043 = vmatpush1.msra.mxu0 0.0
    %2044 = vmatprep.subr.mxu0 0.0
    %2045 = vmatpush1.msra.mxu0 0.0
    %2046 = vmatprep.subr.mxu0 0.0
    %2047 = vmatpush1.msra.mxu0 0.0
    %2048 = vmatprep.subr.mxu0 0.0
    %2049 = vmatpush1.msra.mxu0 0.0
    %2050 = vmatprep.subr.mxu0 0.0
    %2051 = vmatpush1.msra.mxu0 0.0
    %2052 = vmatprep.mubr.f32.mxu0 0.0
    %2053 = vmatmul.mubr.f32.gmra.mrb[0].mxu0 %v1986
    %v2054 = vpop.f32.mrb[0].mxu0
    %v2055 = vadd.f32 0.0, %v2054
    %v2056 = vpop.f32.mrb[0].mxu0
    %2057 = vdwg.mxu0
    %v2059 = vsel %vm262, %v1976, 0
    %2061 = vmatprep.subr.mxu0 0.0
    %2062 = vmatpush1.msra.mxu0 %v1977
    %2063 = vmatprep.subr.mxu0 0.0
    %2064 = vmatpush1.msra.mxu0 %v1978
    %2065 = vmatprep.subr.mxu0 0.0
    %2066 = vmatpush1.msra.mxu0 %v1979
    %2067 = vmatprep.subr.mxu0 0.0
    %2068 = vmatpush1.msra.mxu0 %v1980
    %2069 = vmatprep.subr.mxu0 0.0
    %2070 = vmatpush1.msra.mxu0 0.0
    %2071 = vmatprep.subr.mxu0 0.0
    %2072 = vmatpush1.msra.mxu0 0.0
    %2073 = vmatprep.subr.mxu0 0.0
    %2074 = vmatpush1.msra.mxu0 0.0
    %2075 = vmatprep.subr.mxu0 0.0
    %2076 = vmatpush1.msra.mxu0 0.0
    %2077 = vmatprep.subr.mxu0 0.0
    %2078 = vmatpush1.msra.mxu0 0.0
    %2079 = vmatprep.subr.mxu0 0.0
    %2080 = vmatpush1.msra.mxu0 0.0
    %2081 = vmatprep.subr.mxu0 0.0
    %2082 = vmatpush1.msra.mxu0 0.0
    %2083 = vmatprep.subr.mxu0 0.0
    %2084 = vmatpush1.msra.mxu0 0.0
    %2085 = vmatprep.subr.mxu0 0.0
    %2086 = vmatpush1.msra.mxu0 0.0
    %2087 = vmatprep.subr.mxu0 0.0
    %2088 = vmatpush1.msra.mxu0 0.0
    %2089 = vmatprep.subr.mxu0 0.0
    %2090 = vmatpush1.msra.mxu0 0.0
    %2091 = vmatprep.subr.mxu0 0.0
    %2092 = vmatpush1.msra.mxu0 0.0
    %2093 = vmatprep.subr.mxu0 0.0
    %2094 = vmatpush1.msra.mxu0 0.0
    %2095 = vmatprep.subr.mxu0 0.0
    %2096 = vmatpush1.msra.mxu0 0.0
    %2097 = vmatprep.subr.mxu0 0.0
    %2098 = vmatpush1.msra.mxu0 0.0
    %2099 = vmatprep.subr.mxu0 0.0
    %2100 = vmatpush1.msra.mxu0 0.0
    %2101 = vmatprep.subr.mxu0 0.0
    %2102 = vmatpush1.msra.mxu0 0.0
    %2103 = vmatprep.subr.mxu0 0.0
    %2104 = vmatpush1.msra.mxu0 0.0
    %2105 = vmatprep.subr.mxu0 0.0
    %2106 = vmatpush1.msra.mxu0 0.0
    %2107 = vmatprep.subr.mxu0 0.0
    %2108 = vmatpush1.msra.mxu0 0.0
    %2109 = vmatprep.subr.mxu0 0.0
    %2110 = vmatpush1.msra.mxu0 0.0
    %2111 = vmatprep.subr.mxu0 0.0
    %2112 = vmatpush1.msra.mxu0 0.0
    %2113 = vmatprep.subr.mxu0 0.0
    %2114 = vmatpush1.msra.mxu0 0.0
    %2115 = vmatprep.subr.mxu0 0.0
    %2116 = vmatpush1.msra.mxu0 0.0
    %2117 = vmatprep.subr.mxu0 0.0
    %2118 = vmatpush1.msra.mxu0 0.0
    %2119 = vmatprep.subr.mxu0 0.0
    %2120 = vmatpush1.msra.mxu0 0.0
    %2121 = vmatprep.subr.mxu0 0.0
    %2122 = vmatpush1.msra.mxu0 0.0
    %2123 = vmatprep.subr.mxu0 0.0
    %2124 = vmatpush1.msra.mxu0 0.0
    %2125 = vmatprep.mubr.f32.mxu0 0.0
    %2126 = vmatmul.mubr.f32.gmra.mrb[0].mxu0 %v2059
    %v2127 = vpop.f32.mrb[0].mxu0
    %v2128 = vadd.f32 %v2055, %v2127
    %v2129 = vpop.f32.mrb[0].mxu0
    %2130 = vdwg.mxu0
    %v2131 = vld [vmem:[#allocation28] sm:$0x1]
    %v2133 = vlaneseq
    %v2134 = vshrl.u32 %v2133, 7
    %v2135 = vsub.s32 0, %v2134
    %v2136 = vrot.slane %v2131, %v2135
    %v2138 = vadd.f32 %v2128, %v2136
    %v2139 = vmax.f32 %v2138, 0.0
    %2140 = vst.msk [vmem:[#allocation29] sm:$0xff] %vm262, %v2139
    // Predicated region
    $region122: #{tpu_custom_call.1} parent=1 // pred_check
      _
    $region123: #{tpu_custom_call.1} parent=1 // pred_check_branch
      %2142 = sbr.rel (0) target = $region125
    $region124: #{tpu_custom_call.1} parent=1 // pred_region
      %s2144 = ssub.s32 128, 128
      %2145 = vsyncadd [#allocation7], %s2144
      %s2147 = sshll.u32 [#allocation29], 4
      %s2148 = int_to_ptr.vmem [resolvable:$true] %s2147
      %2150 = dma.vmem_to_hbm [thread:$0]  %s2148, 128, %s15, [#allocation7]
    $region125: #{tpu_custom_call.1} parent=1 // pred_fallthru
      _
    // Predicated region
    $region126: #{tpu_custom_call.1} parent=1 // pred_check
      _
    $region127: #{tpu_custom_call.1} parent=1 // pred_check_branch
      %2152 = sbr.rel (0) target = $region129
    $region128: #{tpu_custom_call.1} parent=1 // pred_region
      %2153 = dma.done [#allocation7], 128
    $region129: #{tpu_custom_call.1} parent=1 // pred_fallthru
      _
    %2154 = vsyncpa [#allocation6], 1
    %2155 = vsyncpa [#allocation9], 1
    %2156 = vsyncpa [#allocation12], 1
    %2157 = vsyncpa [#allocation15], 1
    %2158 = vsyncpa [#allocation18], 1
    %2159 = vsyncpa [#allocation21], 1
    %2160 = vsyncpa [#allocation24], 1
    %2161 = vsyncpa [#allocation27], 1
    %2162 = vsyncpa [#allocation7], 1

</llo_original>
